<compile_context>
chip_gen: v6e
topology: v6e:2x2x1
jax: 0.10.0
libtpu: 0.0.40
codegen_flags: <defaults>
</compile_context>

<pallas_src>
import jax
import jax.numpy as jnp
from jax import lax
from jax.experimental import pallas as pl
from jax.experimental.pallas import tpu as pltpu
from math import sqrt


def _hardmax_attention_kernel(
    q_ref, k_ref, v_ref,
    wq_ref, bq_ref, wk_ref, bk_ref, wv_ref, wo_ref, bvo_ref,
    out_ref, score_ref,
):
    bt, lqt, h = q_ref.shape
    lk = k_ref.shape[1]
    mm = wq_ref.dtype  # matmul-input dtype (f32 or bf16); accumulation is f32.

    # ---- input projections: fold (batch, seq) into one tall MXU M dim -------
    q2 = q_ref[...].reshape(bt * lqt, h)
    k2 = k_ref[...].reshape(bt * lk, h)
    v2 = v_ref[...].reshape(bt * lk, h)

    Q = jnp.dot(q2, wq_ref[...], preferred_element_type=jnp.float32) + bq_ref[...]
    K = jnp.dot(k2, wk_ref[...], preferred_element_type=jnp.float32) + bk_ref[...]
    # V bias deferred: folded into bvo (= bv @ Wo + bo) in the wrapper, since
    # each row of the one-hot score sums to exactly 1.
    Vp = jnp.dot(v2, wv_ref[...], preferred_element_type=jnp.float32)

    Qb = Q.reshape(bt, lqt, h).astype(mm)
    Kb = K.reshape(bt, lk, h).astype(mm)
    Vb = Vp.reshape(bt, lk, h).astype(mm)

    # ---- energy = Q @ K^T (batched; contract last dims, no XLU transpose) ---
    # The reference module's `/ sqrt(hidden_dim)` is dropped: the per-row
    # argmax is invariant under a positive scale and energy is never returned.
    energy = lax.dot_general(
        Qb, Kb, (((2,), (2,)), ((0,), (0,))),
        preferred_element_type=jnp.float32)          # (bt, lqt, lk), f32

    # ---- hard-max: one-hot of the FIRST argmax (torch.argmax tie-break) -----
    m = jnp.max(energy, axis=-1, keepdims=True)
    col = lax.broadcasted_iota(jnp.int32, energy.shape, 2)
    first_idx = jnp.min(jnp.where(energy == m, col, lk), axis=-1, keepdims=True)
    score = (col == first_idx).astype(jnp.float32)
    # TODO(synk): optional boolean mask (masked_fill(-inf) before the argmax)
    # is not plumbed in; the module's default mask=None path is implemented.

    # ---- res = score @ V ; out = res @ Wo + (bv @ Wo + bo) ------------------
    res = jnp.einsum("bqk,bkd->bqd", score.astype(mm), Vb,
                     preferred_element_type=jnp.float32)
    out = jnp.dot(res.reshape(bt * lqt, h).astype(mm), wo_ref[...],
                  preferred_element_type=jnp.float32) + bvo_ref[...]

    out_ref[...] = out.reshape(bt, lqt, h).astype(out_ref.dtype)
    score_ref[...] = score.astype(score_ref.dtype)


def _pick_block(total, cap, align=1):
    """Largest divisor of `total` that is <= cap and (multiple of `align` or
    equal to `total`). Falls back to the full extent."""
    cap = min(total, cap)
    for d in range(cap, 0, -1):
        if total % d == 0 and (d % align == 0 or d == total):
            return d
    return total


def _build_and_run(q, k, v, wq, bq, wk, bk, wv, wo, bvo, *,
                   block_b, block_q, out_dtype, vmem_limit_bytes,
                   single_buffer_consts):
    B, Lq, H = q.shape
    Lk = k.shape[1]
    grid = (B // block_b, Lq // block_q)

    def const_spec(shape):
        idx = lambda b, qi: (0,) * len(shape)
        if single_buffer_consts:
            # Constant index_map -> the block never changes; one buffer is enough.
            return pl.BlockSpec(shape, idx, pipeline_mode=pl.Buffered(1))
        return pl.BlockSpec(shape, idx)

    in_specs = [
        pl.BlockSpec((block_b, block_q, H), lambda b, qi: (b, qi, 0)),   # q
        pl.BlockSpec((block_b, Lk, H), lambda b, qi: (b, 0, 0)),         # k
        pl.BlockSpec((block_b, Lk, H), lambda b, qi: (b, 0, 0)),         # v
        const_spec((H, H)), const_spec((1, H)),                          # wq, bq
        const_spec((H, H)), const_spec((1, H)),                          # wk, bk
        const_spec((H, H)),                                              # wv
        const_spec((H, H)), const_spec((1, H)),                          # wo, bvo
    ]
    out_specs = [
        pl.BlockSpec((block_b, block_q, H), lambda b, qi: (b, qi, 0)),   # out
        pl.BlockSpec((block_b, block_q, Lk), lambda b, qi: (b, qi, 0)),  # score
    ]

    return pl.pallas_call(
        _hardmax_attention_kernel,
        out_shape=(
            jax.ShapeDtypeStruct((B, Lq, H), out_dtype),
            jax.ShapeDtypeStruct((B, Lq, Lk), jnp.float32),
        ),
        grid_spec=pltpu.PrefetchScalarGridSpec(
            num_scalar_prefetch=0,
            grid=grid,
            in_specs=in_specs,
            out_specs=out_specs,
        ),
        compiler_params=pltpu.CompilerParams(
            dimension_semantics=("parallel", "parallel"),
            vmem_limit_bytes=vmem_limit_bytes,
        ),
    )(q, k, v, wq, bq, wk, bk, wv, wo, bvo)


def hardmax_attention(query, key, value, params, *,
                      block_b=None, block_q=None,
                      matmul_dtype=None,
                      vmem_limit_bytes=64 * 1024 * 1024):
    """query: (B, Lq, H), key/value: (B, Lk, H). Returns (out, score)."""
    B, Lq, H = query.shape
    Lk = key.shape[1]
    out_dtype = query.dtype
    mm = query.dtype if matmul_dtype is None else matmul_dtype

    # torch-style (out, in) weights -> (in, out); fold V bias + output bias
    # into a single output-side bias (valid: one-hot score rows sum to 1).
    wq = params["wq"].T.astype(mm)
    wk = params["wk"].T.astype(mm)
    wv = params["wv"].T.astype(mm)
    wo = params["wo"].T.astype(mm)
    bq = params["bq"].reshape(1, H).astype(jnp.float32)
    bk = params["bk"].reshape(1, H).astype(jnp.float32)
    bvo = (params["bv"] @ params["wo"].T + params["bo"]).reshape(1, H).astype(jnp.float32)

    q = query.astype(mm)
    k = key.astype(mm)
    v = value.astype(mm)

    # Tile Lq (keeps the (Lq, Lk) energy tile in VMEM on v7x) and fold several
    # batches per grid step for MXU M-occupancy / per-step overhead.
    if block_q is None:
        block_q = _pick_block(Lq, 256, align=8)
    if block_b is None:
        block_b = _pick_block(B, max(1, 512 // block_q), align=1)

    kwargs = dict(block_b=block_b, block_q=block_q, out_dtype=out_dtype,
                  vmem_limit_bytes=vmem_limit_bytes)
    try:
        return _build_and_run(q, k, v, wq, bq, wk, bk, wv, wo, bvo,
                              single_buffer_consts=True, **kwargs)
    except Exception:
        # pipeline_mode=pl.Buffered(1) not accepted by this jax build:
        # fall back to default (double) buffering for the constant blocks.
        return _build_and_run(q, k, v, wq, bq, wk, bk, wv, wo, bvo,
                              single_buffer_consts=False, **kwargs)


def _reference(query, key, value, params):
    """Pure-JAX reference mirroring the PyTorch module (mask=None path)."""
    H = query.shape[-1]
    lin = lambda x, w, b: x @ w.T + b
    Q = lin(query, params["wq"], params["bq"])
    K = lin(key, params["wk"], params["bk"])
    V = lin(value, params["wv"], params["bv"])
    energy = jnp.einsum("bqd,bkd->bqk", Q, K) / jnp.float32(sqrt(H))
    idx = jnp.argmax(energy, axis=-1)
    score = jax.nn.one_hot(idx, energy.shape[-1], dtype=jnp.float32)
    res = jnp.einsum("bqk,bkd->bqd", score, V)
    out = lin(res, params["wo"], params["bo"])
    return out, score


if __name__ == "__main__":
    B, Lq, Lk, H = 2, 8, 8, 32

    key0 = jax.random.PRNGKey(0)
    ks = jax.random.split(key0, 12)

    # Deterministic synthetic params (torch nn.Linear shapes: W (out,in), b (out,)).
    bound = 1.0 / sqrt(H)
    params = {
        "wq": jax.random.uniform(ks[0], (H, H), jnp.float32, -bound, bound),
        "bq": jax.random.uniform(ks[1], (H,), jnp.float32, -bound, bound),
        "wk": jax.random.uniform(ks[2], (H, H), jnp.float32, -bound, bound),
        "bk": jax.random.uniform(ks[3], (H,), jnp.float32, -bound, bound),
        "wv": jax.random.uniform(ks[4], (H, H), jnp.float32, -bound, bound),
        "bv": jax.random.uniform(ks[5], (H,), jnp.float32, -bound, bound),
        "wo": jax.random.uniform(ks[6], (H, H), jnp.float32, -bound, bound),
        "bo": jax.random.uniform(ks[7], (H,), jnp.float32, -bound, bound),
    }

    query = jax.random.normal(ks[8], (B, Lq, H), jnp.float32)
    key_t = jax.random.normal(ks[9], (B, Lk, H), jnp.float32)
    value = jax.random.normal(ks[10], (B, Lk, H), jnp.float32)

    # f32 path: exact-semantics check against the pure-JAX reference.
    out, score = hardmax_attention(query, key_t, value, params)
    out, score = jax.block_until_ready(out), jax.block_until_ready(score)
    ref_out, ref_score = _reference(query, key_t, value, params)
    assert jnp.allclose(out, ref_out, atol=1e-4, rtol=1e-4)
    assert jnp.allclose(score, ref_score)

    # bf16 matmul-input path (v5e/v6e/v7x throughput mode, f32 accumulation).
    # Structural sanity checks only: exact ties may legitimately resolve to a
    # different (still valid) argmax under reduced matmul-input precision.
    out16, score16 = hardmax_attention(query, key_t, value, params,
                                       matmul_dtype=jnp.bfloat16)
    out16 = jax.block_until_ready(out16)
    score16 = jax.block_until_ready(score16)
    assert out16.shape == (B, Lq, H) and score16.shape == (B, Lq, Lk)
    assert bool(jnp.all(jnp.isfinite(out16)))
    assert bool(jnp.all(score16.sum(axis=-1) == 1.0))
    assert bool(jnp.all((score16 == 0.0) | (score16 == 1.0)))

    print("KERNEL_OK")
</pallas_src>

<mosaic_0001>
module attributes {stable_mosaic.version = 11 : i64} {
  func.func @_hardmax_attention_kernel(%arg0: i32, %arg1: i32, %arg2: memref<2x8x32xf32, #tpu.memory_space<vmem>>, %arg3: memref<2x8x32xf32, #tpu.memory_space<vmem>>, %arg4: memref<2x8x32xf32, #tpu.memory_space<vmem>>, %arg5: memref<32x32xf32, #tpu.memory_space<vmem>>, %arg6: memref<1x32xf32, #tpu.memory_space<vmem>>, %arg7: memref<32x32xf32, #tpu.memory_space<vmem>>, %arg8: memref<1x32xf32, #tpu.memory_space<vmem>>, %arg9: memref<32x32xf32, #tpu.memory_space<vmem>>, %arg10: memref<32x32xf32, #tpu.memory_space<vmem>>, %arg11: memref<1x32xf32, #tpu.memory_space<vmem>>, %arg12: memref<2x8x32xf32, #tpu.memory_space<vmem>>, %arg13: memref<2x8x8xf32, #tpu.memory_space<vmem>>) attributes {dimension_semantics = [#tpu.dimension_semantics<parallel>, #tpu.dimension_semantics<parallel>], iteration_bounds = array<i64: 1, 1>, scalar_prefetch = 0 : i64, scratch_operands = 0 : i64, tpu.core_type = #tpu.core_type<tc>, window_params = [{transform_indices = @transform_0, window_bounds = array<i64: 2, 8, 32>}, {transform_indices = @transform_1, window_bounds = array<i64: 2, 8, 32>}, {transform_indices = @transform_2, window_bounds = array<i64: 2, 8, 32>}, {pipeline_mode = #tpu.pipeline_mode<synchronous>, transform_indices = @transform_3, window_bounds = array<i64: 32, 32>}, {pipeline_mode = #tpu.pipeline_mode<synchronous>, transform_indices = @transform_4, window_bounds = array<i64: 1, 32>}, {pipeline_mode = #tpu.pipeline_mode<synchronous>, transform_indices = @transform_5, window_bounds = array<i64: 32, 32>}, {pipeline_mode = #tpu.pipeline_mode<synchronous>, transform_indices = @transform_6, window_bounds = array<i64: 1, 32>}, {pipeline_mode = #tpu.pipeline_mode<synchronous>, transform_indices = @transform_7, window_bounds = array<i64: 32, 32>}, {pipeline_mode = #tpu.pipeline_mode<synchronous>, transform_indices = @transform_8, window_bounds = array<i64: 32, 32>}, {pipeline_mode = #tpu.pipeline_mode<synchronous>, transform_indices = @transform_9, window_bounds = array<i64: 1, 32>}, {transform_indices = @transform_10, window_bounds = array<i64: 2, 8, 32>}, {transform_indices = @transform_11, window_bounds = array<i64: 2, 8, 8>}]} {
    %c0 = arith.constant 0 : index
    %c0_0 = arith.constant 0 : index
    %c0_1 = arith.constant 0 : index
    %0 = vector.load %arg2[%c0, %c0_0, %c0_1] : memref<2x8x32xf32, #tpu.memory_space<vmem>>, vector<2x8x32xf32>
    %1 = vector.shape_cast %0 : vector<2x8x32xf32> to vector<16x32xf32>
    %c0_2 = arith.constant 0 : index
    %c0_3 = arith.constant 0 : index
    %c0_4 = arith.constant 0 : index
    %2 = vector.load %arg3[%c0_2, %c0_3, %c0_4] : memref<2x8x32xf32, #tpu.memory_space<vmem>>, vector<2x8x32xf32>
    %3 = vector.shape_cast %2 : vector<2x8x32xf32> to vector<16x32xf32>
    %c0_5 = arith.constant 0 : index
    %c0_6 = arith.constant 0 : index
    %c0_7 = arith.constant 0 : index
    %4 = vector.load %arg4[%c0_5, %c0_6, %c0_7] : memref<2x8x32xf32, #tpu.memory_space<vmem>>, vector<2x8x32xf32>
    %5 = vector.shape_cast %4 : vector<2x8x32xf32> to vector<16x32xf32>
    %c0_8 = arith.constant 0 : index
    %c0_9 = arith.constant 0 : index
    %6 = vector.load %arg5[%c0_8, %c0_9] : memref<32x32xf32, #tpu.memory_space<vmem>>, vector<32x32xf32>
    %cst = arith.constant dense<0.000000e+00> : vector<16x32xf32>
    %7 = tpu.matmul %1, %6, %cst {dimension_numbers = #tpu.dot_dimension_numbers<[1], [0], [0], [1], [0, 0, 1, 1], [], []>} : vector<16x32xf32>, vector<32x32xf32>, vector<16x32xf32> -> vector<16x32xf32>
    %c0_10 = arith.constant 0 : index
    %c0_11 = arith.constant 0 : index
    %8 = vector.load %arg6[%c0_10, %c0_11] : memref<1x32xf32, #tpu.memory_space<vmem>>, vector<1x32xf32>
    %9 = vector.broadcast %8 : vector<1x32xf32> to vector<16x32xf32>
    %10 = arith.addf %7, %9 : vector<16x32xf32>
    %c0_12 = arith.constant 0 : index
    %c0_13 = arith.constant 0 : index
    %11 = vector.load %arg7[%c0_12, %c0_13] : memref<32x32xf32, #tpu.memory_space<vmem>>, vector<32x32xf32>
    %cst_14 = arith.constant dense<0.000000e+00> : vector<16x32xf32>
    %12 = tpu.matmul %3, %11, %cst_14 {dimension_numbers = #tpu.dot_dimension_numbers<[1], [0], [0], [1], [0, 0, 1, 1], [], []>} : vector<16x32xf32>, vector<32x32xf32>, vector<16x32xf32> -> vector<16x32xf32>
    %c0_15 = arith.constant 0 : index
    %c0_16 = arith.constant 0 : index
    %13 = vector.load %arg8[%c0_15, %c0_16] : memref<1x32xf32, #tpu.memory_space<vmem>>, vector<1x32xf32>
    %14 = vector.broadcast %13 : vector<1x32xf32> to vector<16x32xf32>
    %15 = arith.addf %12, %14 : vector<16x32xf32>
    %c0_17 = arith.constant 0 : index
    %c0_18 = arith.constant 0 : index
    %16 = vector.load %arg9[%c0_17, %c0_18] : memref<32x32xf32, #tpu.memory_space<vmem>>, vector<32x32xf32>
    %cst_19 = arith.constant dense<0.000000e+00> : vector<16x32xf32>
    %17 = tpu.matmul %5, %16, %cst_19 {dimension_numbers = #tpu.dot_dimension_numbers<[1], [0], [0], [1], [0, 0, 1, 1], [], []>} : vector<16x32xf32>, vector<32x32xf32>, vector<16x32xf32> -> vector<16x32xf32>
    %18 = vector.shape_cast %10 : vector<16x32xf32> to vector<2x8x32xf32>
    %19 = vector.shape_cast %15 : vector<16x32xf32> to vector<2x8x32xf32>
    %20 = vector.shape_cast %17 : vector<16x32xf32> to vector<2x8x32xf32>
    %cst_20 = arith.constant dense<0.000000e+00> : vector<2x8x8xf32>
    %21 = tpu.matmul %18, %19, %cst_20 {dimension_numbers = #tpu.dot_dimension_numbers<[2], [2], [1], [1], [0, 0, 0, 1, 1, 1], [0], [0]>} : vector<2x8x32xf32>, vector<2x8x32xf32>, vector<2x8x8xf32> -> vector<2x8x8xf32>
    %cst_21 = arith.constant dense<0xFF800000> : vector<2x8xf32>
    %22 = vector.multi_reduction <maximumf>, %21, %cst_21 [2] : vector<2x8x8xf32> to vector<2x8xf32>
    %23 = vector.shape_cast %22 : vector<2x8xf32> to vector<2x8x1xf32>
    %24 = tpu.iota {dimensions = array<i32: 2>} : vector<2x8x8xi32>
    %25 = vector.broadcast %23 : vector<2x8x1xf32> to vector<2x8x8xf32>
    %26 = arith.cmpf oeq, %21, %25 : vector<2x8x8xf32>
    %c8_i32 = arith.constant 8 : i32
    %27 = vector.broadcast %c8_i32 : i32 to vector<2x8x8xi32>
    %28 = arith.select %26, %24, %27 : vector<2x8x8xi1>, vector<2x8x8xi32>
    %cst_22 = arith.constant dense<2147483647> : vector<2x8xi32>
    %29 = vector.multi_reduction <minsi>, %28, %cst_22 [2] : vector<2x8x8xi32> to vector<2x8xi32>
    %30 = vector.shape_cast %29 : vector<2x8xi32> to vector<2x8x1xi32>
    %31 = vector.broadcast %30 : vector<2x8x1xi32> to vector<2x8x8xi32>
    %32 = arith.cmpi eq, %24, %31 : vector<2x8x8xi32>
    %33 = arith.extui %32 : vector<2x8x8xi1> to vector<2x8x8xi32>
    %34 = arith.sitofp %33 : vector<2x8x8xi32> to vector<2x8x8xf32>
    "tpu.trace_start"() <{level = 10 : i32, message = "bqk,bkd->bqd"}> : () -> ()
    %cst_23 = arith.constant dense<0.000000e+00> : vector<2x8x32xf32>
    %35 = tpu.matmul %34, %20, %cst_23 {dimension_numbers = #tpu.dot_dimension_numbers<[2], [1], [1], [2], [0, 0, 0, 1, 1, 2], [0], [0]>} : vector<2x8x8xf32>, vector<2x8x32xf32>, vector<2x8x32xf32> -> vector<2x8x32xf32>
    "tpu.trace_stop"() : () -> ()
    %36 = vector.shape_cast %35 : vector<2x8x32xf32> to vector<16x32xf32>
    %c0_24 = arith.constant 0 : index
    %c0_25 = arith.constant 0 : index
    %37 = vector.load %arg10[%c0_24, %c0_25] : memref<32x32xf32, #tpu.memory_space<vmem>>, vector<32x32xf32>
    %cst_26 = arith.constant dense<0.000000e+00> : vector<16x32xf32>
    %38 = tpu.matmul %36, %37, %cst_26 {dimension_numbers = #tpu.dot_dimension_numbers<[1], [0], [0], [1], [0, 0, 1, 1], [], []>} : vector<16x32xf32>, vector<32x32xf32>, vector<16x32xf32> -> vector<16x32xf32>
    %c0_27 = arith.constant 0 : index
    %c0_28 = arith.constant 0 : index
    %39 = vector.load %arg11[%c0_27, %c0_28] : memref<1x32xf32, #tpu.memory_space<vmem>>, vector<1x32xf32>
    %40 = vector.broadcast %39 : vector<1x32xf32> to vector<16x32xf32>
    %41 = arith.addf %38, %40 : vector<16x32xf32>
    %42 = vector.shape_cast %41 : vector<16x32xf32> to vector<2x8x32xf32>
    %c0_29 = arith.constant 0 : index
    %c0_30 = arith.constant 0 : index
    %c0_31 = arith.constant 0 : index
    %43 = vector.load %arg12[%c0_29, %c0_30, %c0_31] : memref<2x8x32xf32, #tpu.memory_space<vmem>>, vector<2x8x32xf32>
    tpu.vector_store %arg12[%c0_29, %c0_30, %c0_31], %42 {strides = array<i32>} : memref<2x8x32xf32, #tpu.memory_space<vmem>>, vector<2x8x32xf32>,
    %c0_32 = arith.constant 0 : index
    %c0_33 = arith.constant 0 : index
    %c0_34 = arith.constant 0 : index
    %44 = vector.load %arg13[%c0_32, %c0_33, %c0_34] : memref<2x8x8xf32, #tpu.memory_space<vmem>>, vector<2x8x8xf32>
    tpu.vector_store %arg13[%c0_32, %c0_33, %c0_34], %34 {strides = array<i32>} : memref<2x8x8xf32, #tpu.memory_space<vmem>>, vector<2x8x8xf32>,
    return
  }
  func.func @transform_0(%arg0: i32, %arg1: i32) -> (i32, i32, i32) {
    %c0_i32 = arith.constant 0 : i32
    %c0_i32_0 = arith.constant 0 : i32
    return %arg0, %arg1, %c0_i32 : i32, i32, i32
  }
  func.func @transform_1(%arg0: i32, %arg1: i32) -> (i32, i32, i32) {
    %c0_i32 = arith.constant 0 : i32
    %c0_i32_0 = arith.constant 0 : i32
    %c0_i32_1 = arith.constant 0 : i32
    return %arg0, %c0_i32, %c0_i32_0 : i32, i32, i32
  }
  func.func @transform_2(%arg0: i32, %arg1: i32) -> (i32, i32, i32) {
    %c0_i32 = arith.constant 0 : i32
    %c0_i32_0 = arith.constant 0 : i32
    %c0_i32_1 = arith.constant 0 : i32
    return %arg0, %c0_i32, %c0_i32_0 : i32, i32, i32
  }
  func.func @transform_3(%arg0: i32, %arg1: i32) -> (i32, i32) {
    %c0_i32 = arith.constant 0 : i32
    %c0_i32_0 = arith.constant 0 : i32
    %c0_i32_1 = arith.constant 0 : i32
    return %c0_i32, %c0_i32_0 : i32, i32
  }
  func.func @transform_4(%arg0: i32, %arg1: i32) -> (i32, i32) {
    %c0_i32 = arith.constant 0 : i32
    %c0_i32_0 = arith.constant 0 : i32
    %c0_i32_1 = arith.constant 0 : i32
    return %c0_i32, %c0_i32_0 : i32, i32
  }
  func.func @transform_5(%arg0: i32, %arg1: i32) -> (i32, i32) {
    %c0_i32 = arith.constant 0 : i32
    %c0_i32_0 = arith.constant 0 : i32
    %c0_i32_1 = arith.constant 0 : i32
    return %c0_i32, %c0_i32_0 : i32, i32
  }
  func.func @transform_6(%arg0: i32, %arg1: i32) -> (i32, i32) {
    %c0_i32 = arith.constant 0 : i32
    %c0_i32_0 = arith.constant 0 : i32
    %c0_i32_1 = arith.constant 0 : i32
    return %c0_i32, %c0_i32_0 : i32, i32
  }
  func.func @transform_7(%arg0: i32, %arg1: i32) -> (i32, i32) {
    %c0_i32 = arith.constant 0 : i32
    %c0_i32_0 = arith.constant 0 : i32
    %c0_i32_1 = arith.constant 0 : i32
    return %c0_i32, %c0_i32_0 : i32, i32
  }
  func.func @transform_8(%arg0: i32, %arg1: i32) -> (i32, i32) {
    %c0_i32 = arith.constant 0 : i32
    %c0_i32_0 = arith.constant 0 : i32
    %c0_i32_1 = arith.constant 0 : i32
    return %c0_i32, %c0_i32_0 : i32, i32
  }
  func.func @transform_9(%arg0: i32, %arg1: i32) -> (i32, i32) {
    %c0_i32 = arith.constant 0 : i32
    %c0_i32_0 = arith.constant 0 : i32
    %c0_i32_1 = arith.constant 0 : i32
    return %c0_i32, %c0_i32_0 : i32, i32
  }
  func.func @transform_10(%arg0: i32, %arg1: i32) -> (i32, i32, i32) {
    %c0_i32 = arith.constant 0 : i32
    %c0_i32_0 = arith.constant 0 : i32
    return %arg0, %arg1, %c0_i32 : i32, i32, i32
  }
  func.func @transform_11(%arg0: i32, %arg1: i32) -> (i32, i32, i32) {
    %c0_i32 = arith.constant 0 : i32
    %c0_i32_0 = arith.constant 0 : i32
    return %arg0, %arg1, %c0_i32 : i32, i32, i32
  }
}

module attributes {stable_mosaic.version = 11 : i64} {
  func.func @_hardmax_attention_kernel(%arg0: i32, %arg1: i32, %arg2: memref<2x8x32xf32, #tpu.memory_space<vmem>>, %arg3: memref<2x8x32xf32, #tpu.memory_space<vmem>>, %arg4: memref<2x8x32xf32, #tpu.memory_space<vmem>>, %arg5: memref<32x32xf32, #tpu.memory_space<vmem>>, %arg6: memref<1x32xf32, #tpu.memory_space<vmem>>, %arg7: memref<32x32xf32, #tpu.memory_space<vmem>>, %arg8: memref<1x32xf32, #tpu.memory_space<vmem>>, %arg9: memref<32x32xf32, #tpu.memory_space<vmem>>, %arg10: memref<32x32xf32, #tpu.memory_space<vmem>>, %arg11: memref<1x32xf32, #tpu.memory_space<vmem>>, %arg12: memref<2x8x32xf32, #tpu.memory_space<vmem>>, %arg13: memref<2x8x8xf32, #tpu.memory_space<vmem>>) attributes {dimension_semantics = [#tpu.dimension_semantics<parallel>, #tpu.dimension_semantics<parallel>], iteration_bounds = array<i64: 1, 1>, scalar_prefetch = 0 : i64, scratch_operands = 0 : i64, tpu.core_type = #tpu.core_type<tc>, window_params = [{transform_indices = @transform_0, window_bounds = array<i64: 2, 8, 32>}, {transform_indices = @transform_1, window_bounds = array<i64: 2, 8, 32>}, {transform_indices = @transform_2, window_bounds = array<i64: 2, 8, 32>}, {pipeline_mode = #tpu.pipeline_mode<synchronous>, transform_indices = @transform_3, window_bounds = array<i64: 32, 32>}, {pipeline_mode = #tpu.pipeline_mode<synchronous>, transform_indices = @transform_4, window_bounds = array<i64: 1, 32>}, {pipeline_mode = #tpu.pipeline_mode<synchronous>, transform_indices = @transform_5, window_bounds = array<i64: 32, 32>}, {pipeline_mode = #tpu.pipeline_mode<synchronous>, transform_indices = @transform_6, window_bounds = array<i64: 1, 32>}, {pipeline_mode = #tpu.pipeline_mode<synchronous>, transform_indices = @transform_7, window_bounds = array<i64: 32, 32>}, {pipeline_mode = #tpu.pipeline_mode<synchronous>, transform_indices = @transform_8, window_bounds = array<i64: 32, 32>}, {pipeline_mode = #tpu.pipeline_mode<synchronous>, transform_indices = @transform_9, window_bounds = array<i64: 1, 32>}, {transform_indices = @transform_10, window_bounds = array<i64: 2, 8, 32>}, {transform_indices = @transform_11, window_bounds = array<i64: 2, 8, 8>}]} {
    %c0 = arith.constant 0 : index
    %c0_0 = arith.constant 0 : index
    %c0_1 = arith.constant 0 : index
    %0 = vector.load %arg2[%c0, %c0_0, %c0_1] : memref<2x8x32xf32, #tpu.memory_space<vmem>>, vector<2x8x32xf32>
    %1 = vector.shape_cast %0 : vector<2x8x32xf32> to vector<16x32xf32>
    %c0_2 = arith.constant 0 : index
    %c0_3 = arith.constant 0 : index
    %c0_4 = arith.constant 0 : index
    %2 = vector.load %arg3[%c0_2, %c0_3, %c0_4] : memref<2x8x32xf32, #tpu.memory_space<vmem>>, vector<2x8x32xf32>
    %3 = vector.shape_cast %2 : vector<2x8x32xf32> to vector<16x32xf32>
    %c0_5 = arith.constant 0 : index
    %c0_6 = arith.constant 0 : index
    %c0_7 = arith.constant 0 : index
    %4 = vector.load %arg4[%c0_5, %c0_6, %c0_7] : memref<2x8x32xf32, #tpu.memory_space<vmem>>, vector<2x8x32xf32>
    %5 = vector.shape_cast %4 : vector<2x8x32xf32> to vector<16x32xf32>
    %c0_8 = arith.constant 0 : index
    %c0_9 = arith.constant 0 : index
    %6 = vector.load %arg5[%c0_8, %c0_9] : memref<32x32xf32, #tpu.memory_space<vmem>>, vector<32x32xf32>
    %cst = arith.constant dense<0.000000e+00> : vector<16x32xf32>
    %7 = tpu.matmul %1, %6, %cst {dimension_numbers = #tpu.dot_dimension_numbers<[1], [0], [0], [1], [0, 0, 1, 1], [], []>} : vector<16x32xf32>, vector<32x32xf32>, vector<16x32xf32> -> vector<16x32xf32>
    %c0_10 = arith.constant 0 : index
    %c0_11 = arith.constant 0 : index
    %8 = vector.load %arg6[%c0_10, %c0_11] : memref<1x32xf32, #tpu.memory_space<vmem>>, vector<1x32xf32>
    %9 = vector.broadcast %8 : vector<1x32xf32> to vector<16x32xf32>
    %10 = arith.addf %7, %9 : vector<16x32xf32>
    %c0_12 = arith.constant 0 : index
    %c0_13 = arith.constant 0 : index
    %11 = vector.load %arg7[%c0_12, %c0_13] : memref<32x32xf32, #tpu.memory_space<vmem>>, vector<32x32xf32>
    %cst_14 = arith.constant dense<0.000000e+00> : vector<16x32xf32>
    %12 = tpu.matmul %3, %11, %cst_14 {dimension_numbers = #tpu.dot_dimension_numbers<[1], [0], [0], [1], [0, 0, 1, 1], [], []>} : vector<16x32xf32>, vector<32x32xf32>, vector<16x32xf32> -> vector<16x32xf32>
    %c0_15 = arith.constant 0 : index
    %c0_16 = arith.constant 0 : index
    %13 = vector.load %arg8[%c0_15, %c0_16] : memref<1x32xf32, #tpu.memory_space<vmem>>, vector<1x32xf32>
    %14 = vector.broadcast %13 : vector<1x32xf32> to vector<16x32xf32>
    %15 = arith.addf %12, %14 : vector<16x32xf32>
    %c0_17 = arith.constant 0 : index
    %c0_18 = arith.constant 0 : index
    %16 = vector.load %arg9[%c0_17, %c0_18] : memref<32x32xf32, #tpu.memory_space<vmem>>, vector<32x32xf32>
    %cst_19 = arith.constant dense<0.000000e+00> : vector<16x32xf32>
    %17 = tpu.matmul %5, %16, %cst_19 {dimension_numbers = #tpu.dot_dimension_numbers<[1], [0], [0], [1], [0, 0, 1, 1], [], []>} : vector<16x32xf32>, vector<32x32xf32>, vector<16x32xf32> -> vector<16x32xf32>
    %18 = vector.shape_cast %10 : vector<16x32xf32> to vector<2x8x32xf32>
    %19 = vector.shape_cast %15 : vector<16x32xf32> to vector<2x8x32xf32>
    %20 = vector.shape_cast %17 : vector<16x32xf32> to vector<2x8x32xf32>
    %cst_20 = arith.constant dense<0.000000e+00> : vector<2x8x8xf32>
    %21 = tpu.matmul %18, %19, %cst_20 {dimension_numbers = #tpu.dot_dimension_numbers<[2], [2], [1], [1], [0, 0, 0, 1, 1, 1], [0], [0]>} : vector<2x8x32xf32>, vector<2x8x32xf32>, vector<2x8x8xf32> -> vector<2x8x8xf32>
    %cst_21 = arith.constant dense<0xFF800000> : vector<2x8xf32>
    %22 = vector.multi_reduction <maximumf>, %21, %cst_21 [2] : vector<2x8x8xf32> to vector<2x8xf32>
    %23 = vector.shape_cast %22 : vector<2x8xf32> to vector<2x8x1xf32>
    %24 = tpu.iota {dimensions = array<i32: 2>} : vector<2x8x8xi32>
    %25 = vector.broadcast %23 : vector<2x8x1xf32> to vector<2x8x8xf32>
    %26 = arith.cmpf oeq, %21, %25 : vector<2x8x8xf32>
    %c8_i32 = arith.constant 8 : i32
    %27 = vector.broadcast %c8_i32 : i32 to vector<2x8x8xi32>
    %28 = arith.select %26, %24, %27 : vector<2x8x8xi1>, vector<2x8x8xi32>
    %cst_22 = arith.constant dense<2147483647> : vector<2x8xi32>
    %29 = vector.multi_reduction <minsi>, %28, %cst_22 [2] : vector<2x8x8xi32> to vector<2x8xi32>
    %30 = vector.shape_cast %29 : vector<2x8xi32> to vector<2x8x1xi32>
    %31 = vector.broadcast %30 : vector<2x8x1xi32> to vector<2x8x8xi32>
    %32 = arith.cmpi eq, %24, %31 : vector<2x8x8xi32>
    %33 = arith.extui %32 : vector<2x8x8xi1> to vector<2x8x8xi32>
    %34 = arith.sitofp %33 : vector<2x8x8xi32> to vector<2x8x8xf32>
    "tpu.trace_start"() <{level = 10 : i32, message = "bqk,bkd->bqd"}> : () -> ()
    %cst_23 = arith.constant dense<0.000000e+00> : vector<2x8x32xf32>
    %35 = tpu.matmul %34, %20, %cst_23 {dimension_numbers = #tpu.dot_dimension_numbers<[2], [1], [1], [2], [0, 0, 0, 1, 1, 2], [0], [0]>} : vector<2x8x8xf32>, vector<2x8x32xf32>, vector<2x8x32xf32> -> vector<2x8x32xf32>
    "tpu.trace_stop"() : () -> ()
    %36 = vector.shape_cast %35 : vector<2x8x32xf32> to vector<16x32xf32>
    %c0_24 = arith.constant 0 : index
    %c0_25 = arith.constant 0 : index
    %37 = vector.load %arg10[%c0_24, %c0_25] : memref<32x32xf32, #tpu.memory_space<vmem>>, vector<32x32xf32>
    %cst_26 = arith.constant dense<0.000000e+00> : vector<16x32xf32>
    %38 = tpu.matmul %36, %37, %cst_26 {dimension_numbers = #tpu.dot_dimension_numbers<[1], [0], [0], [1], [0, 0, 1, 1], [], []>} : vector<16x32xf32>, vector<32x32xf32>, vector<16x32xf32> -> vector<16x32xf32>
    %c0_27 = arith.constant 0 : index
    %c0_28 = arith.constant 0 : index
    %39 = vector.load %arg11[%c0_27, %c0_28] : memref<1x32xf32, #tpu.memory_space<vmem>>, vector<1x32xf32>
    %40 = vector.broadcast %39 : vector<1x32xf32> to vector<16x32xf32>
    %41 = arith.addf %38, %40 : vector<16x32xf32>
    %42 = vector.shape_cast %41 : vector<16x32xf32> to vector<2x8x32xf32>
    %c0_29 = arith.constant 0 : index
    %c0_30 = arith.constant 0 : index
    %c0_31 = arith.constant 0 : index
    %43 = vector.load %arg12[%c0_29, %c0_30, %c0_31] : memref<2x8x32xf32, #tpu.memory_space<vmem>>, vector<2x8x32xf32>
    tpu.vector_store %arg12[%c0_29, %c0_30, %c0_31], %42 {strides = array<i32>} : memref<2x8x32xf32, #tpu.memory_space<vmem>>, vector<2x8x32xf32>,
    %c0_32 = arith.constant 0 : index
    %c0_33 = arith.constant 0 : index
    %c0_34 = arith.constant 0 : index
    %44 = vector.load %arg13[%c0_32, %c0_33, %c0_34] : memref<2x8x8xf32, #tpu.memory_space<vmem>>, vector<2x8x8xf32>
    tpu.vector_store %arg13[%c0_32, %c0_33, %c0_34], %34 {strides = array<i32>} : memref<2x8x8xf32, #tpu.memory_space<vmem>>, vector<2x8x8xf32>,
    return
  }
  func.func @transform_0(%arg0: i32, %arg1: i32) -> (i32, i32, i32) {
    %c0_i32 = arith.constant 0 : i32
    %c0_i32_0 = arith.constant 0 : i32
    return %arg0, %arg1, %c0_i32 : i32, i32, i32
  }
  func.func @transform_1(%arg0: i32, %arg1: i32) -> (i32, i32, i32) {
    %c0_i32 = arith.constant 0 : i32
    %c0_i32_0 = arith.constant 0 : i32
    %c0_i32_1 = arith.constant 0 : i32
    return %arg0, %c0_i32, %c0_i32_0 : i32, i32, i32
  }
  func.func @transform_2(%arg0: i32, %arg1: i32) -> (i32, i32, i32) {
    %c0_i32 = arith.constant 0 : i32
    %c0_i32_0 = arith.constant 0 : i32
    %c0_i32_1 = arith.constant 0 : i32
    return %arg0, %c0_i32, %c0_i32_0 : i32, i32, i32
  }
  func.func @transform_3(%arg0: i32, %arg1: i32) -> (i32, i32) {
    %c0_i32 = arith.constant 0 : i32
    %c0_i32_0 = arith.constant 0 : i32
    %c0_i32_1 = arith.constant 0 : i32
    return %c0_i32, %c0_i32_0 : i32, i32
  }
  func.func @transform_4(%arg0: i32, %arg1: i32) -> (i32, i32) {
    %c0_i32 = arith.constant 0 : i32
    %c0_i32_0 = arith.constant 0 : i32
    %c0_i32_1 = arith.constant 0 : i32
    return %c0_i32, %c0_i32_0 : i32, i32
  }
  func.func @transform_5(%arg0: i32, %arg1: i32) -> (i32, i32) {
    %c0_i32 = arith.constant 0 : i32
    %c0_i32_0 = arith.constant 0 : i32
    %c0_i32_1 = arith.constant 0 : i32
    return %c0_i32, %c0_i32_0 : i32, i32
  }
  func.func @transform_6(%arg0: i32, %arg1: i32) -> (i32, i32) {
    %c0_i32 = arith.constant 0 : i32
    %c0_i32_0 = arith.constant 0 : i32
    %c0_i32_1 = arith.constant 0 : i32
    return %c0_i32, %c0_i32_0 : i32, i32
  }
  func.func @transform_7(%arg0: i32, %arg1: i32) -> (i32, i32) {
    %c0_i32 = arith.constant 0 : i32
    %c0_i32_0 = arith.constant 0 : i32
    %c0_i32_1 = arith.constant 0 : i32
    return %c0_i32, %c0_i32_0 : i32, i32
  }
  func.func @transform_8(%arg0: i32, %arg1: i32) -> (i32, i32) {
    %c0_i32 = arith.constant 0 : i32
    %c0_i32_0 = arith.constant 0 : i32
    %c0_i32_1 = arith.constant 0 : i32
    return %c0_i32, %c0_i32_0 : i32, i32
  }
  func.func @transform_9(%arg0: i32, %arg1: i32) -> (i32, i32) {
    %c0_i32 = arith.constant 0 : i32
    %c0_i32_0 = arith.constant 0 : i32
    %c0_i32_1 = arith.constant 0 : i32
    return %c0_i32, %c0_i32_0 : i32, i32
  }
  func.func @transform_10(%arg0: i32, %arg1: i32) -> (i32, i32, i32) {
    %c0_i32 = arith.constant 0 : i32
    %c0_i32_0 = arith.constant 0 : i32
    return %arg0, %arg1, %c0_i32 : i32, i32, i32
  }
  func.func @transform_11(%arg0: i32, %arg1: i32) -> (i32, i32, i32) {
    %c0_i32 = arith.constant 0 : i32
    %c0_i32_0 = arith.constant 0 : i32
    return %arg0, %arg1, %c0_i32 : i32, i32, i32
  }
}

</mosaic_0001>

<llo_original>
// kernel: tpu_custom_call.1
$region0: #{tpu_custom_call.1}
  #allocation0 [shape = 'u32[]', space=smem, size = 0x4, offset = 0x4, fixed_abs, tag = 'smem constant byte address 0x4 - core index']
  #allocation1 [shape = 'u32[144,128]{1,0:T(1,128)}', space=vmem, size = 0x12000, scoped, tag = 'internal scratch']
  %s0 = inlined_call_operand.hbm [shape: f32[2,8,32], index: 0, kind: input, shape index: {}]
  %s1 = inlined_call_operand.hbm [shape: f32[2,8,32], index: 1, kind: input, shape index: {}]
  %s2 = inlined_call_operand.hbm [shape: f32[2,8,32], index: 2, kind: input, shape index: {}]
  %s3 = inlined_call_operand.hbm [shape: f32[32,32], index: 3, kind: input, shape index: {}]
  %s4 = inlined_call_operand.vmem [shape: f32[1,32], index: 4, kind: input, shape index: {}]
  %s5 = inlined_call_operand.hbm [shape: f32[32,32], index: 5, kind: input, shape index: {}]
  %s6 = inlined_call_operand.vmem [shape: f32[1,32], index: 6, kind: input, shape index: {}]
  %s7 = inlined_call_operand.hbm [shape: f32[32,32], index: 7, kind: input, shape index: {}]
  %s8 = inlined_call_operand.hbm [shape: f32[32,32], index: 8, kind: input, shape index: {}]
  %s9 = inlined_call_operand.vmem [shape: f32[1,32], index: 9, kind: input, shape index: {}]
  %s10 = inlined_call_operand.hbm [shape: f32[2,8,32], index: 10, kind: output, shape index: {0}]
  %s11 = inlined_call_operand.hbm [shape: f32[2,8,8], index: 11, kind: output, shape index: {1}]
  %12 = xla_tuple %s10, %s11
  %s13 = sld [smem:[#allocation0]]
  $region86: #{tpu_custom_call.1} parent=0
    _
  %s15 = ssub.s32 1, %s13
  %s16 = scalar_select 0, %s15, %s13
  $region1: #{tpu_custom_call.1} parent=0
    #allocation2 [shape = 'u8[8192]{0}', space=vmem, size = 0x2000, scoped, tag = 'input window, operand 0, single buffered']
    #allocation3 [shape = 's32[1]{0}', space=sflag, size = 0x4, scoped, tag = 'scoped memory for tpu_custom_call.1']
    #allocation4 [shape = 's32[1]{0}', space=sflag, size = 0x4, scoped, tag = 'scoped memory for tpu_custom_call.1']
    #allocation5 [shape = 'u8[8192]{0}', space=vmem, size = 0x2000, scoped, tag = 'input window, operand 1, single buffered']
    #allocation6 [shape = 's32[1]{0}', space=sflag, size = 0x4, scoped, tag = 'scoped memory for tpu_custom_call.1']
    #allocation7 [shape = 'u8[8192]{0}', space=vmem, size = 0x2000, scoped, tag = 'input window, operand 2, single buffered']
    #allocation8 [shape = 'u8[16384]{0}', space=vmem, size = 0x4000, scoped, tag = 'input window, operand 3, single buffered']
    #allocation9 [shape = 's32[1]{0}', space=sflag, size = 0x4, scoped, tag = 'scoped memory for tpu_custom_call.1']
    #allocation10 [shape = 'u8[16384]{0}', space=vmem, size = 0x4000, scoped, tag = 'input window, operand 5, single buffered']
    #allocation11 [shape = 'u8[16384]{0}', space=vmem, size = 0x4000, scoped, tag = 'input window, operand 7, single buffered']
    #allocation12 [shape = 's32[1]{0}', space=sflag, size = 0x4, scoped, tag = 'scoped memory for tpu_custom_call.1']
    #allocation13 [shape = 'u8[16384]{0}', space=vmem, size = 0x4000, scoped, tag = 'input window, operand 8, single buffered']
    #allocation14 [shape = 'u8[8192]{0}', space=vmem, size = 0x2000, scoped, tag = 'output window, operand 0, single buffered']
    #allocation15 [shape = 'u8[8192]{0}', space=vmem, size = 0x2000, scoped, tag = 'output window, operand 1, single buffered']
    #allocation16 [shape = 's32[1]{0}', space=sflag, size = 0x4, scoped, tag = 'scoped memory for tpu_custom_call.1']
    %17 = vsyncpa [#allocation3], 0
    %18 = vsyncpa [#allocation6], 0
    %19 = vsyncpa [#allocation9], 0
    %20 = vsyncpa [#allocation12], 0
    %21 = vsyncpa [#allocation4], 0
    %22 = vsyncpa [#allocation16], 0
    // Predicated region
    $region2: #{tpu_custom_call.1} parent=1 // pred_check
      _
    $region3: #{tpu_custom_call.1} parent=1 // pred_check_branch
      %24 = sbr.rel (0) target = $region5
    $region4: #{tpu_custom_call.1} parent=1 // pred_region
      %s26 = ssub.s32 256, 256
      %27 = vsyncadd [#allocation3], %s26
      %s28 = sshll.u32 [#allocation2], 4
      %s29 = int_to_ptr.vmem [resolvable:$true] %s28
      %34 = dma.hbm_to_vmem [thread:$0]  %s0, 256, %s29, [#allocation3], 128, 128, 8
    $region5: #{tpu_custom_call.1} parent=1 // pred_fallthru
      _
    // Predicated region
    $region6: #{tpu_custom_call.1} parent=1 // pred_check
      _
    $region7: #{tpu_custom_call.1} parent=1 // pred_check_branch
      %36 = sbr.rel (0) target = $region9
    $region8: #{tpu_custom_call.1} parent=1 // pred_region
      %s38 = ssub.s32 256, 256
      %39 = vsyncadd [#allocation6], %s38
      %s40 = sshll.u32 [#allocation5], 4
      %s41 = int_to_ptr.vmem [resolvable:$true] %s40
      %46 = dma.hbm_to_vmem [thread:$0]  %s1, 256, %s41, [#allocation6], 128, 128, 8
    $region9: #{tpu_custom_call.1} parent=1 // pred_fallthru
      _
    // Predicated region
    $region10: #{tpu_custom_call.1} parent=1 // pred_check
      _
    $region11: #{tpu_custom_call.1} parent=1 // pred_check_branch
      %48 = sbr.rel (0) target = $region13
    $region12: #{tpu_custom_call.1} parent=1 // pred_region
      %s50 = ssub.s32 256, 256
      %51 = vsyncadd [#allocation6], %s50
      %s52 = sshll.u32 [#allocation7], 4
      %s53 = int_to_ptr.vmem [resolvable:$true] %s52
      %58 = dma.hbm_to_vmem [thread:$0]  %s2, 256, %s53, [#allocation6], 128, 128, 8
    $region13: #{tpu_custom_call.1} parent=1 // pred_fallthru
      _
    // Predicated region
    $region14: #{tpu_custom_call.1} parent=1 // pred_check
      _
    $region15: #{tpu_custom_call.1} parent=1 // pred_check_branch
      %60 = sbr.rel (0) target = $region17
    $region16: #{tpu_custom_call.1} parent=1 // pred_region
      %s62 = ssub.s32 512, 512
      %63 = vsyncadd [#allocation9], %s62
      %s64 = sshll.u32 [#allocation8], 4
      %s65 = int_to_ptr.vmem [resolvable:$true] %s64
      %70 = dma.hbm_to_vmem [thread:$0]  %s3, 512, %s65, [#allocation9], 128, 128, 8
    $region17: #{tpu_custom_call.1} parent=1 // pred_fallthru
      _
    // Predicated region
    $region18: #{tpu_custom_call.1} parent=1 // pred_check
      _
    $region19: #{tpu_custom_call.1} parent=1 // pred_check_branch
      %72 = sbr.rel (0) target = $region21
    $region20: #{tpu_custom_call.1} parent=1 // pred_region
      _
    $region21: #{tpu_custom_call.1} parent=1 // pred_fallthru
      _
    // Predicated region
    $region22: #{tpu_custom_call.1} parent=1 // pred_check
      _
    $region23: #{tpu_custom_call.1} parent=1 // pred_check_branch
      %74 = sbr.rel (0) target = $region25
    $region24: #{tpu_custom_call.1} parent=1 // pred_region
      %s76 = ssub.s32 512, 512
      %77 = vsyncadd [#allocation9], %s76
      %s78 = sshll.u32 [#allocation10], 4
      %s79 = int_to_ptr.vmem [resolvable:$true] %s78
      %84 = dma.hbm_to_vmem [thread:$0]  %s5, 512, %s79, [#allocation9], 128, 128, 8
    $region25: #{tpu_custom_call.1} parent=1 // pred_fallthru
      _
    // Predicated region
    $region26: #{tpu_custom_call.1} parent=1 // pred_check
      _
    $region27: #{tpu_custom_call.1} parent=1 // pred_check_branch
      %86 = sbr.rel (0) target = $region29
    $region28: #{tpu_custom_call.1} parent=1 // pred_region
      _
    $region29: #{tpu_custom_call.1} parent=1 // pred_fallthru
      _
    // Predicated region
    $region30: #{tpu_custom_call.1} parent=1 // pred_check
      _
    $region31: #{tpu_custom_call.1} parent=1 // pred_check_branch
      %88 = sbr.rel (0) target = $region33
    $region32: #{tpu_custom_call.1} parent=1 // pred_region
      %s90 = ssub.s32 512, 512
      %91 = vsyncadd [#allocation12], %s90
      %s92 = sshll.u32 [#allocation11], 4
      %s93 = int_to_ptr.vmem [resolvable:$true] %s92
      %98 = dma.hbm_to_vmem [thread:$0]  %s7, 512, %s93, [#allocation12], 128, 128, 8
    $region33: #{tpu_custom_call.1} parent=1 // pred_fallthru
      _
    // Predicated region
    $region34: #{tpu_custom_call.1} parent=1 // pred_check
      _
    $region35: #{tpu_custom_call.1} parent=1 // pred_check_branch
      %100 = sbr.rel (0) target = $region37
    $region36: #{tpu_custom_call.1} parent=1 // pred_region
      %s102 = ssub.s32 512, 512
      %103 = vsyncadd [#allocation12], %s102
      %s104 = sshll.u32 [#allocation13], 4
      %s105 = int_to_ptr.vmem [resolvable:$true] %s104
      %110 = dma.hbm_to_vmem [thread:$0]  %s8, 512, %s105, [#allocation12], 128, 128, 8
    $region37: #{tpu_custom_call.1} parent=1 // pred_fallthru
      _
    // Predicated region
    $region38: #{tpu_custom_call.1} parent=1 // pred_check
      _
    $region39: #{tpu_custom_call.1} parent=1 // pred_check_branch
      %112 = sbr.rel (0) target = $region41
    $region40: #{tpu_custom_call.1} parent=1 // pred_region
      _
    $region41: #{tpu_custom_call.1} parent=1 // pred_fallthru
      _
    // Predicated region
    $region42: #{tpu_custom_call.1} parent=1 // pred_check
      _
    $region43: #{tpu_custom_call.1} parent=1 // pred_check_branch
      %114 = sbr.rel (0) target = $region45
    $region44: #{tpu_custom_call.1} parent=1 // pred_region
      %115 = dma.done [#allocation3], 256
    $region45: #{tpu_custom_call.1} parent=1 // pred_fallthru
      _
    // Predicated region
    $region46: #{tpu_custom_call.1} parent=1 // pred_check
      _
    $region47: #{tpu_custom_call.1} parent=1 // pred_check_branch
      %117 = sbr.rel (0) target = $region49
    $region48: #{tpu_custom_call.1} parent=1 // pred_region
      %118 = dma.done [#allocation6], 256
    $region49: #{tpu_custom_call.1} parent=1 // pred_fallthru
      _
    // Predicated region
    $region50: #{tpu_custom_call.1} parent=1 // pred_check
      _
    $region51: #{tpu_custom_call.1} parent=1 // pred_check_branch
      %120 = sbr.rel (0) target = $region53
    $region52: #{tpu_custom_call.1} parent=1 // pred_region
      %121 = dma.done [#allocation6], 256
    $region53: #{tpu_custom_call.1} parent=1 // pred_fallthru
      _
    // Predicated region
    $region54: #{tpu_custom_call.1} parent=1 // pred_check
      _
    $region55: #{tpu_custom_call.1} parent=1 // pred_check_branch
      %123 = sbr.rel (0) target = $region57
    $region56: #{tpu_custom_call.1} parent=1 // pred_region
      %124 = dma.done [#allocation9], 512
    $region57: #{tpu_custom_call.1} parent=1 // pred_fallthru
      _
    // Predicated region
    $region58: #{tpu_custom_call.1} parent=1 // pred_check
      _
    $region59: #{tpu_custom_call.1} parent=1 // pred_check_branch
      %126 = sbr.rel (0) target = $region61
    $region60: #{tpu_custom_call.1} parent=1 // pred_region
      %127 = dma.done [#allocation9], 512
    $region61: #{tpu_custom_call.1} parent=1 // pred_fallthru
      _
    // Predicated region
    $region62: #{tpu_custom_call.1} parent=1 // pred_check
      _
    $region63: #{tpu_custom_call.1} parent=1 // pred_check_branch
      %129 = sbr.rel (0) target = $region65
    $region64: #{tpu_custom_call.1} parent=1 // pred_region
      %130 = dma.done [#allocation12], 512
    $region65: #{tpu_custom_call.1} parent=1 // pred_fallthru
      _
    // Predicated region
    $region66: #{tpu_custom_call.1} parent=1 // pred_check
      _
    $region67: #{tpu_custom_call.1} parent=1 // pred_check_branch
      %132 = sbr.rel (0) target = $region69
    $region68: #{tpu_custom_call.1} parent=1 // pred_region
      %133 = dma.done [#allocation12], 512
    $region69: #{tpu_custom_call.1} parent=1 // pred_fallthru
      _
    %v134 = vld [vmem:[#allocation2] sm:$0xff]
    %v135 = vld [vmem:[#allocation2 + $0x8] sm:$0xff]
    %v136 = vld [vmem:[#allocation5] sm:$0xff]
    %v137 = vld [vmem:[#allocation5 + $0x8] sm:$0xff]
    %v138 = vld [vmem:[#allocation7] sm:$0xff]
    %v139 = vld [vmem:[#allocation7 + $0x8] sm:$0xff]
    %v140 = vld [vmem:[#allocation8] sm:$0xff]
    %v141 = vld [vmem:[#allocation8 + $0x8] sm:$0xff]
    %v142 = vld [vmem:[#allocation8 + $0x10] sm:$0xff]
    %v143 = vld [vmem:[#allocation8 + $0x18] sm:$0xff]
    %v144 = vld [vmem:[%s4] sm:$0x1]
    %v146 = vlaneseq
    %v147 = vshrl.u32 %v146, 7
    %v148 = vsub.s32 0, %v147
    %v149 = vrot.slane %v144, %v148
    %vm151 = vcmask 261120
    %v153 = vsel %vm151, %v134, 0
    %v156 = vsel %vm151, %v135, 0
    %158 = vmatprep.subr.mxu0 0.0
    %159 = vmatpush1.msra.mxu0 0.0
    %160 = vmatprep.subr.mxu0 0.0
    %161 = vmatpush1.msra.mxu0 0.0
    %162 = vmatprep.subr.mxu0 0.0
    %163 = vmatpush1.msra.mxu0 0.0
    %164 = vmatprep.subr.mxu0 0.0
    %165 = vmatpush1.msra.mxu0 0.0
    %166 = vmatprep.subr.mxu0 0.0
    %167 = vmatpush1.msra.mxu0 0.0
    %168 = vmatprep.subr.mxu0 0.0
    %169 = vmatpush1.msra.mxu0 0.0
    %170 = vmatprep.subr.mxu0 0.0
    %171 = vmatpush1.msra.mxu0 0.0
    %172 = vmatprep.subr.mxu0 0.0
    %173 = vmatpush1.msra.mxu0 0.0
    %174 = vmatprep.subr.mxu0 0.0
    %175 = vmatpush1.msra.mxu0 0.0
    %176 = vmatprep.subr.mxu0 0.0
    %177 = vmatpush1.msra.mxu0 0.0
    %178 = vmatprep.subr.mxu0 0.0
    %179 = vmatpush1.msra.mxu0 0.0
    %180 = vmatprep.subr.mxu0 0.0
    %181 = vmatpush1.msra.mxu0 0.0
    %182 = vmatprep.subr.mxu0 0.0
    %183 = vmatpush1.msra.mxu0 %v143
    %184 = vmatprep.subr.mxu0 0.0
    %185 = vmatpush1.msra.mxu0 %v142
    %186 = vmatprep.subr.mxu0 0.0
    %187 = vmatpush1.msra.mxu0 %v141
    %188 = vmatprep.subr.mxu0 0.0
    %189 = vmatpush1.msra.mxu0 %v140
    %190 = vmatprep.subr.mxu0 0.0
    %191 = vmatpush2.msra.mxu0 0.0
    %192 = vmatprep.subr.mxu0 0.0
    %193 = vmatpush2.msra.mxu0 0.0
    %194 = vmatprep.subr.mxu0 0.0
    %195 = vmatpush2.msra.mxu0 0.0
    %196 = vmatprep.subr.mxu0 0.0
    %197 = vmatpush2.msra.mxu0 0.0
    %198 = vmatprep.subr.mxu0 0.0
    %199 = vmatpush2.msra.mxu0 0.0
    %200 = vmatprep.subr.mxu0 0.0
    %201 = vmatpush2.msra.mxu0 0.0
    %202 = vmatprep.subr.mxu0 0.0
    %203 = vmatpush2.msra.mxu0 0.0
    %204 = vmatprep.subr.mxu0 0.0
    %205 = vmatpush2.msra.mxu0 0.0
    %206 = vmatprep.subr.mxu0 0.0
    %207 = vmatpush2.msra.mxu0 0.0
    %208 = vmatprep.subr.mxu0 0.0
    %209 = vmatpush2.msra.mxu0 0.0
    %210 = vmatprep.subr.mxu0 0.0
    %211 = vmatpush2.msra.mxu0 0.0
    %212 = vmatprep.subr.mxu0 0.0
    %213 = vmatpush2.msra.mxu0 0.0
    %214 = vmatprep.subr.mxu0 0.0
    %215 = vmatpush2.msra.mxu0 0.0
    %216 = vmatprep.subr.mxu0 0.0
    %217 = vmatpush2.msra.mxu0 0.0
    %218 = vmatprep.subr.mxu0 0.0
    %219 = vmatpush2.msra.mxu0 0.0
    %220 = vmatprep.subr.mxu0 0.0
    %221 = vmatpush2.msra.mxu0 0.0
    %222 = vmatprep.mubr.f32.mxu0 0.0
    %223 = vmatmul.mubr.f32.gmra.mxu0 %v153
    %v224 = vpop.f32.mrf.mxu0
    %v225 = vadd.f32 %v149, %v224
    %v226 = vpop.f32.mrf.mxu0
    %227 = vmatprep.mubr.f32.mxu0 0.0
    %228 = vmatmul.mubr.f32.gmra.mxu0 %v156
    %v229 = vpop.f32.mrf.mxu0
    %v230 = vadd.f32 %v149, %v229
    %v231 = vpop.f32.mrf.mxu0
    %232 = vdwg.mxu0
    %v233 = vld [vmem:[#allocation10] sm:$0xff]
    %v234 = vld [vmem:[#allocation10 + $0x8] sm:$0xff]
    %v235 = vld [vmem:[#allocation10 + $0x10] sm:$0xff]
    %v236 = vld [vmem:[#allocation10 + $0x18] sm:$0xff]
    %v237 = vld [vmem:[%s6] sm:$0x1]
    %v239 = vlaneseq
    %v240 = vshrl.u32 %v239, 7
    %v241 = vsub.s32 0, %v240
    %v242 = vrot.slane %v237, %v241
    %v245 = vsel %vm151, %v136, 0
    %v248 = vsel %vm151, %v137, 0
    %250 = vmatprep.subr.mxu0 0.0
    %251 = vmatpush1.msra.mxu0 0.0
    %252 = vmatprep.subr.mxu0 0.0
    %253 = vmatpush1.msra.mxu0 0.0
    %254 = vmatprep.subr.mxu0 0.0
    %255 = vmatpush1.msra.mxu0 0.0
    %256 = vmatprep.subr.mxu0 0.0
    %257 = vmatpush1.msra.mxu0 0.0
    %258 = vmatprep.subr.mxu0 0.0
    %259 = vmatpush1.msra.mxu0 0.0
    %260 = vmatprep.subr.mxu0 0.0
    %261 = vmatpush1.msra.mxu0 0.0
    %262 = vmatprep.subr.mxu0 0.0
    %263 = vmatpush1.msra.mxu0 0.0
    %264 = vmatprep.subr.mxu0 0.0
    %265 = vmatpush1.msra.mxu0 0.0
    %266 = vmatprep.subr.mxu0 0.0
    %267 = vmatpush1.msra.mxu0 0.0
    %268 = vmatprep.subr.mxu0 0.0
    %269 = vmatpush1.msra.mxu0 0.0
    %270 = vmatprep.subr.mxu0 0.0
    %271 = vmatpush1.msra.mxu0 0.0
    %272 = vmatprep.subr.mxu0 0.0
    %273 = vmatpush1.msra.mxu0 0.0
    %274 = vmatprep.subr.mxu0 0.0
    %275 = vmatpush1.msra.mxu0 %v236
    %276 = vmatprep.subr.mxu0 0.0
    %277 = vmatpush1.msra.mxu0 %v235
    %278 = vmatprep.subr.mxu0 0.0
    %279 = vmatpush1.msra.mxu0 %v234
    %280 = vmatprep.subr.mxu0 0.0
    %281 = vmatpush1.msra.mxu0 %v233
    %282 = vmatprep.subr.mxu0 0.0
    %283 = vmatpush2.msra.mxu0 0.0
    %284 = vmatprep.subr.mxu0 0.0
    %285 = vmatpush2.msra.mxu0 0.0
    %286 = vmatprep.subr.mxu0 0.0
    %287 = vmatpush2.msra.mxu0 0.0
    %288 = vmatprep.subr.mxu0 0.0
    %289 = vmatpush2.msra.mxu0 0.0
    %290 = vmatprep.subr.mxu0 0.0
    %291 = vmatpush2.msra.mxu0 0.0
    %292 = vmatprep.subr.mxu0 0.0
    %293 = vmatpush2.msra.mxu0 0.0
    %294 = vmatprep.subr.mxu0 0.0
    %295 = vmatpush2.msra.mxu0 0.0
    %296 = vmatprep.subr.mxu0 0.0
    %297 = vmatpush2.msra.mxu0 0.0
    %298 = vmatprep.subr.mxu0 0.0
    %299 = vmatpush2.msra.mxu0 0.0
    %300 = vmatprep.subr.mxu0 0.0
    %301 = vmatpush2.msra.mxu0 0.0
    %302 = vmatprep.subr.mxu0 0.0
    %303 = vmatpush2.msra.mxu0 0.0
    %304 = vmatprep.subr.mxu0 0.0
    %305 = vmatpush2.msra.mxu0 0.0
    %306 = vmatprep.subr.mxu0 0.0
    %307 = vmatpush2.msra.mxu0 0.0
    %308 = vmatprep.subr.mxu0 0.0
    %309 = vmatpush2.msra.mxu0 0.0
    %310 = vmatprep.subr.mxu0 0.0
    %311 = vmatpush2.msra.mxu0 0.0
    %312 = vmatprep.subr.mxu0 0.0
    %313 = vmatpush2.msra.mxu0 0.0
    %314 = vmatprep.mubr.f32.mxu0 0.0
    %315 = vmatmul.mubr.f32.gmra.mxu0 %v245
    %v316 = vpop.f32.mrf.mxu0
    %v317 = vadd.f32 %v242, %v316
    %v318 = vpop.f32.mrf.mxu0
    %319 = vmatprep.mubr.f32.mxu0 0.0
    %320 = vmatmul.mubr.f32.gmra.mxu0 %v248
    %v321 = vpop.f32.mrf.mxu0
    %v322 = vadd.f32 %v242, %v321
    %v323 = vpop.f32.mrf.mxu0
    %324 = vdwg.mxu0
    %v325 = vld [vmem:[#allocation11] sm:$0xff]
    %v326 = vld [vmem:[#allocation11 + $0x8] sm:$0xff]
    %v327 = vld [vmem:[#allocation11 + $0x10] sm:$0xff]
    %v328 = vld [vmem:[#allocation11 + $0x18] sm:$0xff]
    %v330 = vsel %vm151, %v138, 0
    %v333 = vsel %vm151, %v139, 0
    %335 = vmatprep.subr.mxu0 0.0
    %336 = vmatpush1.msra.mxu0 0.0
    %337 = vmatprep.subr.mxu0 0.0
    %338 = vmatpush1.msra.mxu0 0.0
    %339 = vmatprep.subr.mxu0 0.0
    %340 = vmatpush1.msra.mxu0 0.0
    %341 = vmatprep.subr.mxu0 0.0
    %342 = vmatpush1.msra.mxu0 0.0
    %343 = vmatprep.subr.mxu0 0.0
    %344 = vmatpush1.msra.mxu0 0.0
    %345 = vmatprep.subr.mxu0 0.0
    %346 = vmatpush1.msra.mxu0 0.0
    %347 = vmatprep.subr.mxu0 0.0
    %348 = vmatpush1.msra.mxu0 0.0
    %349 = vmatprep.subr.mxu0 0.0
    %350 = vmatpush1.msra.mxu0 0.0
    %351 = vmatprep.subr.mxu0 0.0
    %352 = vmatpush1.msra.mxu0 0.0
    %353 = vmatprep.subr.mxu0 0.0
    %354 = vmatpush1.msra.mxu0 0.0
    %355 = vmatprep.subr.mxu0 0.0
    %356 = vmatpush1.msra.mxu0 0.0
    %357 = vmatprep.subr.mxu0 0.0
    %358 = vmatpush1.msra.mxu0 0.0
    %359 = vmatprep.subr.mxu0 0.0
    %360 = vmatpush1.msra.mxu0 %v328
    %361 = vmatprep.subr.mxu0 0.0
    %362 = vmatpush1.msra.mxu0 %v327
    %363 = vmatprep.subr.mxu0 0.0
    %364 = vmatpush1.msra.mxu0 %v326
    %365 = vmatprep.subr.mxu0 0.0
    %366 = vmatpush1.msra.mxu0 %v325
    %367 = vmatprep.subr.mxu0 0.0
    %368 = vmatpush2.msra.mxu0 0.0
    %369 = vmatprep.subr.mxu0 0.0
    %370 = vmatpush2.msra.mxu0 0.0
    %371 = vmatprep.subr.mxu0 0.0
    %372 = vmatpush2.msra.mxu0 0.0
    %373 = vmatprep.subr.mxu0 0.0
    %374 = vmatpush2.msra.mxu0 0.0
    %375 = vmatprep.subr.mxu0 0.0
    %376 = vmatpush2.msra.mxu0 0.0
    %377 = vmatprep.subr.mxu0 0.0
    %378 = vmatpush2.msra.mxu0 0.0
    %379 = vmatprep.subr.mxu0 0.0
    %380 = vmatpush2.msra.mxu0 0.0
    %381 = vmatprep.subr.mxu0 0.0
    %382 = vmatpush2.msra.mxu0 0.0
    %383 = vmatprep.subr.mxu0 0.0
    %384 = vmatpush2.msra.mxu0 0.0
    %385 = vmatprep.subr.mxu0 0.0
    %386 = vmatpush2.msra.mxu0 0.0
    %387 = vmatprep.subr.mxu0 0.0
    %388 = vmatpush2.msra.mxu0 0.0
    %389 = vmatprep.subr.mxu0 0.0
    %390 = vmatpush2.msra.mxu0 0.0
    %391 = vmatprep.subr.mxu0 0.0
    %392 = vmatpush2.msra.mxu0 0.0
    %393 = vmatprep.subr.mxu0 0.0
    %394 = vmatpush2.msra.mxu0 0.0
    %395 = vmatprep.subr.mxu0 0.0
    %396 = vmatpush2.msra.mxu0 0.0
    %397 = vmatprep.subr.mxu0 0.0
    %398 = vmatpush2.msra.mxu0 0.0
    %399 = vmatprep.mubr.f32.mxu0 0.0
    %400 = vmatmul.mubr.f32.gmra.mxu0 %v330
    %v401 = vpop.f32.mrf.mxu0
    %v402 = vadd.f32 0.0, %v401
    %v403 = vpop.f32.mrf.mxu0
    %404 = vmatprep.mubr.f32.mxu0 0.0
    %405 = vmatmul.mubr.f32.gmra.mxu0 %v333
    %v406 = vpop.f32.mrf.mxu0
    %v407 = vadd.f32 0.0, %v406
    %v408 = vpop.f32.mrf.mxu0
    %409 = vdwg.mxu0
    %v411 = vsel %vm151, %v225, 0
    %v414 = vsel %vm151, %v317, 0
    %416 = vmatprep.subr.mxu0 0.0
    %417 = vmatpush1.xpose.msra.mxu0 0.0
    %418 = vmatprep.subr.mxu0 0.0
    %419 = vmatpush1.xpose.msra.mxu0 0.0
    %420 = vmatprep.subr.mxu0 0.0
    %421 = vmatpush1.xpose.msra.mxu0 0.0
    %422 = vmatprep.subr.mxu0 0.0
    %423 = vmatpush1.xpose.msra.mxu0 0.0
    %424 = vmatprep.subr.mxu0 0.0
    %425 = vmatpush1.xpose.msra.mxu0 0.0
    %426 = vmatprep.subr.mxu0 0.0
    %427 = vmatpush1.xpose.msra.mxu0 0.0
    %428 = vmatprep.subr.mxu0 0.0
    %429 = vmatpush1.xpose.msra.mxu0 0.0
    %430 = vmatprep.subr.mxu0 0.0
    %431 = vmatpush1.xpose.msra.mxu0 0.0
    %432 = vmatprep.subr.mxu0 0.0
    %433 = vmatpush1.xpose.msra.mxu0 0.0
    %434 = vmatprep.subr.mxu0 0.0
    %435 = vmatpush1.xpose.msra.mxu0 0.0
    %436 = vmatprep.subr.mxu0 0.0
    %437 = vmatpush1.xpose.msra.mxu0 0.0
    %438 = vmatprep.subr.mxu0 0.0
    %439 = vmatpush1.xpose.msra.mxu0 0.0
    %440 = vmatprep.subr.mxu0 0.0
    %441 = vmatpush1.xpose.msra.mxu0 0.0
    %442 = vmatprep.subr.mxu0 0.0
    %443 = vmatpush1.xpose.msra.mxu0 0.0
    %444 = vmatprep.subr.mxu0 0.0
    %445 = vmatpush1.xpose.msra.mxu0 0.0
    %446 = vmatprep.subr.mxu0 0.0
    %447 = vmatpush1.xpose.msra.mxu0 %v414
    %448 = vmatprep.subr.mxu0 0.0
    %449 = vmatpush2.xpose.msra.mxu0 0.0
    %450 = vmatprep.subr.mxu0 0.0
    %451 = vmatpush2.xpose.msra.mxu0 0.0
    %452 = vmatprep.subr.mxu0 0.0
    %453 = vmatpush2.xpose.msra.mxu0 0.0
    %454 = vmatprep.subr.mxu0 0.0
    %455 = vmatpush2.xpose.msra.mxu0 0.0
    %456 = vmatprep.subr.mxu0 0.0
    %457 = vmatpush2.xpose.msra.mxu0 0.0
    %458 = vmatprep.subr.mxu0 0.0
    %459 = vmatpush2.xpose.msra.mxu0 0.0
    %460 = vmatprep.subr.mxu0 0.0
    %461 = vmatpush2.xpose.msra.mxu0 0.0
    %462 = vmatprep.subr.mxu0 0.0
    %463 = vmatpush2.xpose.msra.mxu0 0.0
    %464 = vmatprep.subr.mxu0 0.0
    %465 = vmatpush2.xpose.msra.mxu0 0.0
    %466 = vmatprep.subr.mxu0 0.0
    %467 = vmatpush2.xpose.msra.mxu0 0.0
    %468 = vmatprep.subr.mxu0 0.0
    %469 = vmatpush2.xpose.msra.mxu0 0.0
    %470 = vmatprep.subr.mxu0 0.0
    %471 = vmatpush2.xpose.msra.mxu0 0.0
    %472 = vmatprep.subr.mxu0 0.0
    %473 = vmatpush2.xpose.msra.mxu0 0.0
    %474 = vmatprep.subr.mxu0 0.0
    %475 = vmatpush2.xpose.msra.mxu0 0.0
    %476 = vmatprep.subr.mxu0 0.0
    %477 = vmatpush2.xpose.msra.mxu0 0.0
    %478 = vmatprep.subr.mxu0 0.0
    %479 = vmatpush2.xpose.msra.mxu0 0.0
    %480 = vmatprep.mubr.f32.mxu0 0.0
    %481 = vmatmul.mubr.f32.gmra.mxu0 %v411
    %v482 = vpop.f32.mrf.mxu0
    %v483 = vadd.f32 0.0, %v482
    %v484 = vpop.f32.mrf.mxu0
    %485 = vdwg.mxu0
    %v487 = vsel %vm151, %v230, 0
    %v490 = vsel %vm151, %v322, 0
    %492 = vmatprep.subr.mxu0 0.0
    %493 = vmatpush1.xpose.msra.mxu0 0.0
    %494 = vmatprep.subr.mxu0 0.0
    %495 = vmatpush1.xpose.msra.mxu0 0.0
    %496 = vmatprep.subr.mxu0 0.0
    %497 = vmatpush1.xpose.msra.mxu0 0.0
    %498 = vmatprep.subr.mxu0 0.0
    %499 = vmatpush1.xpose.msra.mxu0 0.0
    %500 = vmatprep.subr.mxu0 0.0
    %501 = vmatpush1.xpose.msra.mxu0 0.0
    %502 = vmatprep.subr.mxu0 0.0
    %503 = vmatpush1.xpose.msra.mxu0 0.0
    %504 = vmatprep.subr.mxu0 0.0
    %505 = vmatpush1.xpose.msra.mxu0 0.0
    %506 = vmatprep.subr.mxu0 0.0
    %507 = vmatpush1.xpose.msra.mxu0 0.0
    %508 = vmatprep.subr.mxu0 0.0
    %509 = vmatpush1.xpose.msra.mxu0 0.0
    %510 = vmatprep.subr.mxu0 0.0
    %511 = vmatpush1.xpose.msra.mxu0 0.0
    %512 = vmatprep.subr.mxu0 0.0
    %513 = vmatpush1.xpose.msra.mxu0 0.0
    %514 = vmatprep.subr.mxu0 0.0
    %515 = vmatpush1.xpose.msra.mxu0 0.0
    %516 = vmatprep.subr.mxu0 0.0
    %517 = vmatpush1.xpose.msra.mxu0 0.0
    %518 = vmatprep.subr.mxu0 0.0
    %519 = vmatpush1.xpose.msra.mxu0 0.0
    %520 = vmatprep.subr.mxu0 0.0
    %521 = vmatpush1.xpose.msra.mxu0 0.0
    %522 = vmatprep.subr.mxu0 0.0
    %523 = vmatpush1.xpose.msra.mxu0 %v490
    %524 = vmatprep.subr.mxu0 0.0
    %525 = vmatpush2.xpose.msra.mxu0 0.0
    %526 = vmatprep.subr.mxu0 0.0
    %527 = vmatpush2.xpose.msra.mxu0 0.0
    %528 = vmatprep.subr.mxu0 0.0
    %529 = vmatpush2.xpose.msra.mxu0 0.0
    %530 = vmatprep.subr.mxu0 0.0
    %531 = vmatpush2.xpose.msra.mxu0 0.0
    %532 = vmatprep.subr.mxu0 0.0
    %533 = vmatpush2.xpose.msra.mxu0 0.0
    %534 = vmatprep.subr.mxu0 0.0
    %535 = vmatpush2.xpose.msra.mxu0 0.0
    %536 = vmatprep.subr.mxu0 0.0
    %537 = vmatpush2.xpose.msra.mxu0 0.0
    %538 = vmatprep.subr.mxu0 0.0
    %539 = vmatpush2.xpose.msra.mxu0 0.0
    %540 = vmatprep.subr.mxu0 0.0
    %541 = vmatpush2.xpose.msra.mxu0 0.0
    %542 = vmatprep.subr.mxu0 0.0
    %543 = vmatpush2.xpose.msra.mxu0 0.0
    %544 = vmatprep.subr.mxu0 0.0
    %545 = vmatpush2.xpose.msra.mxu0 0.0
    %546 = vmatprep.subr.mxu0 0.0
    %547 = vmatpush2.xpose.msra.mxu0 0.0
    %548 = vmatprep.subr.mxu0 0.0
    %549 = vmatpush2.xpose.msra.mxu0 0.0
    %550 = vmatprep.subr.mxu0 0.0
    %551 = vmatpush2.xpose.msra.mxu0 0.0
    %552 = vmatprep.subr.mxu0 0.0
    %553 = vmatpush2.xpose.msra.mxu0 0.0
    %554 = vmatprep.subr.mxu0 0.0
    %555 = vmatpush2.xpose.msra.mxu0 0.0
    %556 = vmatprep.mubr.f32.mxu0 0.0
    %557 = vmatmul.mubr.f32.gmra.mxu0 %v487
    %v558 = vpop.f32.mrf.mxu0
    %v559 = vadd.f32 0.0, %v558
    %v560 = vpop.f32.mrf.mxu0
    %561 = vdwg.mxu0
    %vm562 = vcmask 64512
    %v563 = vsel %vm562, %v483, -inf
    %564 = vmax.xlane.f32.xlu0 %v563
    %v565 = vpop.xlane.xlu0 %564
    %v566 = vsel %vm562, %v559, -inf
    %567 = vmax.xlane.f32.xlu0 %v566
    %v568 = vpop.xlane.xlu0 %567
    %v569 = vlaneseq
    %v570 = vand.u32 %v569, 127
    %vm571 = vcmp.eq.f32.partialorder %v483, %v565
    %vm572 = vcmp.eq.f32.partialorder %v559, %v568
    %v573 = vsel %vm571, %v570, 8
    %v574 = vsel %vm572, %v570, 8
    %v575 = vsel %vm562, %v573, 2147483647
    %v576 = vand.u32 %v575, 65535
    %v577 = vshra.s32 %v575, 16
    %v578 = vcvt.s32.f32 %v576
    %v579 = vcvt.s32.f32 %v577
    %580 = vmin.xlane.f32.xlu0 %v579
    %v581 = vpop.xlane.xlu0 %580
    %vm582 = vcmp.eq.f32.partialorder %v579, %v581
    %v583 = vsel %vm582, %v578, inf
    %584 = vmin.xlane.f32.xlu0 %v583
    %v585 = vpop.xlane.xlu0 %584
    %v586 = vcvt.f32.s32 %v585
    %v587 = vcvt.f32.s32 %v581
    %v588 = vshll.u32 %v587, 16
    %v589 = vadd.s32 %v588, %v586
    %v590 = vsel %vm562, %v574, 2147483647
    %v591 = vand.u32 %v590, 65535
    %v592 = vshra.s32 %v590, 16
    %v593 = vcvt.s32.f32 %v591
    %v594 = vcvt.s32.f32 %v592
    %595 = vmin.xlane.f32.xlu0 %v594
    %v596 = vpop.xlane.xlu0 %595
    %vm597 = vcmp.eq.f32.partialorder %v594, %v596
    %v598 = vsel %vm597, %v593, inf
    %599 = vmin.xlane.f32.xlu0 %v598
    %v600 = vpop.xlane.xlu0 %599
    %v601 = vcvt.f32.s32 %v600
    %v602 = vcvt.f32.s32 %v596
    %v603 = vshll.u32 %v602, 16
    %v604 = vadd.s32 %v603, %v601
    %vm605 = vcmp.eq.s32.totalorder %v570, %v589
    %vm606 = vcmp.eq.s32.totalorder %v570, %v604
    %v607 = vsel %vm605, 1, 0
    %v608 = vsel %vm606, 1, 0
    %v609 = vcvt.s32.f32 %v607
    %v610 = vcvt.s32.f32 %v608
    %v612 = vsel %vm562, %v609, 0
    %614 = vmatprep.subr.mxu0 0.0
    %615 = vmatpush1.msra.mxu0 0.0
    %616 = vmatprep.subr.mxu0 0.0
    %617 = vmatpush1.msra.mxu0 0.0
    %618 = vmatprep.subr.mxu0 0.0
    %619 = vmatpush1.msra.mxu0 0.0
    %620 = vmatprep.subr.mxu0 0.0
    %621 = vmatpush1.msra.mxu0 0.0
    %622 = vmatprep.subr.mxu0 0.0
    %623 = vmatpush1.msra.mxu0 0.0
    %624 = vmatprep.subr.mxu0 0.0
    %625 = vmatpush1.msra.mxu0 0.0
    %626 = vmatprep.subr.mxu0 0.0
    %627 = vmatpush1.msra.mxu0 0.0
    %628 = vmatprep.subr.mxu0 0.0
    %629 = vmatpush1.msra.mxu0 0.0
    %630 = vmatprep.subr.mxu0 0.0
    %631 = vmatpush1.msra.mxu0 0.0
    %632 = vmatprep.subr.mxu0 0.0
    %633 = vmatpush1.msra.mxu0 0.0
    %634 = vmatprep.subr.mxu0 0.0
    %635 = vmatpush1.msra.mxu0 0.0
    %636 = vmatprep.subr.mxu0 0.0
    %637 = vmatpush1.msra.mxu0 0.0
    %638 = vmatprep.subr.mxu0 0.0
    %639 = vmatpush1.msra.mxu0 0.0
    %640 = vmatprep.subr.mxu0 0.0
    %641 = vmatpush1.msra.mxu0 0.0
    %642 = vmatprep.subr.mxu0 0.0
    %643 = vmatpush1.msra.mxu0 0.0
    %644 = vmatprep.subr.mxu0 0.0
    %645 = vmatpush1.msra.mxu0 %v402
    %646 = vmatprep.subr.mxu0 0.0
    %647 = vmatpush2.msra.mxu0 0.0
    %648 = vmatprep.subr.mxu0 0.0
    %649 = vmatpush2.msra.mxu0 0.0
    %650 = vmatprep.subr.mxu0 0.0
    %651 = vmatpush2.msra.mxu0 0.0
    %652 = vmatprep.subr.mxu0 0.0
    %653 = vmatpush2.msra.mxu0 0.0
    %654 = vmatprep.subr.mxu0 0.0
    %655 = vmatpush2.msra.mxu0 0.0
    %656 = vmatprep.subr.mxu0 0.0
    %657 = vmatpush2.msra.mxu0 0.0
    %658 = vmatprep.subr.mxu0 0.0
    %659 = vmatpush2.msra.mxu0 0.0
    %660 = vmatprep.subr.mxu0 0.0
    %661 = vmatpush2.msra.mxu0 0.0
    %662 = vmatprep.subr.mxu0 0.0
    %663 = vmatpush2.msra.mxu0 0.0
    %664 = vmatprep.subr.mxu0 0.0
    %665 = vmatpush2.msra.mxu0 0.0
    %666 = vmatprep.subr.mxu0 0.0
    %667 = vmatpush2.msra.mxu0 0.0
    %668 = vmatprep.subr.mxu0 0.0
    %669 = vmatpush2.msra.mxu0 0.0
    %670 = vmatprep.subr.mxu0 0.0
    %671 = vmatpush2.msra.mxu0 0.0
    %672 = vmatprep.subr.mxu0 0.0
    %673 = vmatpush2.msra.mxu0 0.0
    %674 = vmatprep.subr.mxu0 0.0
    %675 = vmatpush2.msra.mxu0 0.0
    %676 = vmatprep.subr.mxu0 0.0
    %677 = vmatpush2.msra.mxu0 0.0
    %678 = vmatprep.mubr.f32.mxu0 0.0
    %679 = vmatmul.mubr.f32.gmra.mxu0 %v612
    %v680 = vpop.f32.mrf.mxu0
    %v681 = vadd.f32 0.0, %v680
    %v682 = vpop.f32.mrf.mxu0
    %683 = vdwg.mxu0
    %v685 = vsel %vm562, %v610, 0
    %687 = vmatprep.subr.mxu0 0.0
    %688 = vmatpush1.msra.mxu0 0.0
    %689 = vmatprep.subr.mxu0 0.0
    %690 = vmatpush1.msra.mxu0 0.0
    %691 = vmatprep.subr.mxu0 0.0
    %692 = vmatpush1.msra.mxu0 0.0
    %693 = vmatprep.subr.mxu0 0.0
    %694 = vmatpush1.msra.mxu0 0.0
    %695 = vmatprep.subr.mxu0 0.0
    %696 = vmatpush1.msra.mxu0 0.0
    %697 = vmatprep.subr.mxu0 0.0
    %698 = vmatpush1.msra.mxu0 0.0
    %699 = vmatprep.subr.mxu0 0.0
    %700 = vmatpush1.msra.mxu0 0.0
    %701 = vmatprep.subr.mxu0 0.0
    %702 = vmatpush1.msra.mxu0 0.0
    %703 = vmatprep.subr.mxu0 0.0
    %704 = vmatpush1.msra.mxu0 0.0
    %705 = vmatprep.subr.mxu0 0.0
    %706 = vmatpush1.msra.mxu0 0.0
    %707 = vmatprep.subr.mxu0 0.0
    %708 = vmatpush1.msra.mxu0 0.0
    %709 = vmatprep.subr.mxu0 0.0
    %710 = vmatpush1.msra.mxu0 0.0
    %711 = vmatprep.subr.mxu0 0.0
    %712 = vmatpush1.msra.mxu0 0.0
    %713 = vmatprep.subr.mxu0 0.0
    %714 = vmatpush1.msra.mxu0 0.0
    %715 = vmatprep.subr.mxu0 0.0
    %716 = vmatpush1.msra.mxu0 0.0
    %717 = vmatprep.subr.mxu0 0.0
    %718 = vmatpush1.msra.mxu0 %v407
    %719 = vmatprep.subr.mxu0 0.0
    %720 = vmatpush2.msra.mxu0 0.0
    %721 = vmatprep.subr.mxu0 0.0
    %722 = vmatpush2.msra.mxu0 0.0
    %723 = vmatprep.subr.mxu0 0.0
    %724 = vmatpush2.msra.mxu0 0.0
    %725 = vmatprep.subr.mxu0 0.0
    %726 = vmatpush2.msra.mxu0 0.0
    %727 = vmatprep.subr.mxu0 0.0
    %728 = vmatpush2.msra.mxu0 0.0
    %729 = vmatprep.subr.mxu0 0.0
    %730 = vmatpush2.msra.mxu0 0.0
    %731 = vmatprep.subr.mxu0 0.0
    %732 = vmatpush2.msra.mxu0 0.0
    %733 = vmatprep.subr.mxu0 0.0
    %734 = vmatpush2.msra.mxu0 0.0
    %735 = vmatprep.subr.mxu0 0.0
    %736 = vmatpush2.msra.mxu0 0.0
    %737 = vmatprep.subr.mxu0 0.0
    %738 = vmatpush2.msra.mxu0 0.0
    %739 = vmatprep.subr.mxu0 0.0
    %740 = vmatpush2.msra.mxu0 0.0
    %741 = vmatprep.subr.mxu0 0.0
    %742 = vmatpush2.msra.mxu0 0.0
    %743 = vmatprep.subr.mxu0 0.0
    %744 = vmatpush2.msra.mxu0 0.0
    %745 = vmatprep.subr.mxu0 0.0
    %746 = vmatpush2.msra.mxu0 0.0
    %747 = vmatprep.subr.mxu0 0.0
    %748 = vmatpush2.msra.mxu0 0.0
    %749 = vmatprep.subr.mxu0 0.0
    %750 = vmatpush2.msra.mxu0 0.0
    %751 = vmatprep.mubr.f32.mxu0 0.0
    %752 = vmatmul.mubr.f32.gmra.mxu0 %v685
    %v753 = vpop.f32.mrf.mxu0
    %v754 = vadd.f32 0.0, %v753
    %v755 = vpop.f32.mrf.mxu0
    %756 = vdwg.mxu0
    %v757 = vld [vmem:[#allocation13] sm:$0xff]
    %v758 = vld [vmem:[#allocation13 + $0x8] sm:$0xff]
    %v759 = vld [vmem:[#allocation13 + $0x10] sm:$0xff]
    %v760 = vld [vmem:[#allocation13 + $0x18] sm:$0xff]
    %v761 = vld [vmem:[%s9] sm:$0x1]
    %v763 = vlaneseq
    %v764 = vshrl.u32 %v763, 7
    %v765 = vsub.s32 0, %v764
    %v766 = vrot.slane %v761, %v765
    %v769 = vsel %vm151, %v681, 0
    %v772 = vsel %vm151, %v754, 0
    %774 = vmatprep.subr.mxu0 0.0
    %775 = vmatpush1.msra.mxu0 0.0
    %776 = vmatprep.subr.mxu0 0.0
    %777 = vmatpush1.msra.mxu0 0.0
    %778 = vmatprep.subr.mxu0 0.0
    %779 = vmatpush1.msra.mxu0 0.0
    %780 = vmatprep.subr.mxu0 0.0
    %781 = vmatpush1.msra.mxu0 0.0
    %782 = vmatprep.subr.mxu0 0.0
    %783 = vmatpush1.msra.mxu0 0.0
    %784 = vmatprep.subr.mxu0 0.0
    %785 = vmatpush1.msra.mxu0 0.0
    %786 = vmatprep.subr.mxu0 0.0
    %787 = vmatpush1.msra.mxu0 0.0
    %788 = vmatprep.subr.mxu0 0.0
    %789 = vmatpush1.msra.mxu0 0.0
    %790 = vmatprep.subr.mxu0 0.0
    %791 = vmatpush1.msra.mxu0 0.0
    %792 = vmatprep.subr.mxu0 0.0
    %793 = vmatpush1.msra.mxu0 0.0
    %794 = vmatprep.subr.mxu0 0.0
    %795 = vmatpush1.msra.mxu0 0.0
    %796 = vmatprep.subr.mxu0 0.0
    %797 = vmatpush1.msra.mxu0 0.0
    %798 = vmatprep.subr.mxu0 0.0
    %799 = vmatpush1.msra.mxu0 %v760
    %800 = vmatprep.subr.mxu0 0.0
    %801 = vmatpush1.msra.mxu0 %v759
    %802 = vmatprep.subr.mxu0 0.0
    %803 = vmatpush1.msra.mxu0 %v758
    %804 = vmatprep.subr.mxu0 0.0
    %805 = vmatpush1.msra.mxu0 %v757
    %806 = vmatprep.subr.mxu0 0.0
    %807 = vmatpush2.msra.mxu0 0.0
    %808 = vmatprep.subr.mxu0 0.0
    %809 = vmatpush2.msra.mxu0 0.0
    %810 = vmatprep.subr.mxu0 0.0
    %811 = vmatpush2.msra.mxu0 0.0
    %812 = vmatprep.subr.mxu0 0.0
    %813 = vmatpush2.msra.mxu0 0.0
    %814 = vmatprep.subr.mxu0 0.0
    %815 = vmatpush2.msra.mxu0 0.0
    %816 = vmatprep.subr.mxu0 0.0
    %817 = vmatpush2.msra.mxu0 0.0
    %818 = vmatprep.subr.mxu0 0.0
    %819 = vmatpush2.msra.mxu0 0.0
    %820 = vmatprep.subr.mxu0 0.0
    %821 = vmatpush2.msra.mxu0 0.0
    %822 = vmatprep.subr.mxu0 0.0
    %823 = vmatpush2.msra.mxu0 0.0
    %824 = vmatprep.subr.mxu0 0.0
    %825 = vmatpush2.msra.mxu0 0.0
    %826 = vmatprep.subr.mxu0 0.0
    %827 = vmatpush2.msra.mxu0 0.0
    %828 = vmatprep.subr.mxu0 0.0
    %829 = vmatpush2.msra.mxu0 0.0
    %830 = vmatprep.subr.mxu0 0.0
    %831 = vmatpush2.msra.mxu0 0.0
    %832 = vmatprep.subr.mxu0 0.0
    %833 = vmatpush2.msra.mxu0 0.0
    %834 = vmatprep.subr.mxu0 0.0
    %835 = vmatpush2.msra.mxu0 0.0
    %836 = vmatprep.subr.mxu0 0.0
    %837 = vmatpush2.msra.mxu0 0.0
    %838 = vmatprep.mubr.f32.mxu0 0.0
    %839 = vmatmul.mubr.f32.gmra.mxu0 %v769
    %v840 = vpop.f32.mrf.mxu0
    %v841 = vadd.f32 %v766, %v840
    %v842 = vpop.f32.mrf.mxu0
    %843 = vmatprep.mubr.f32.mxu0 0.0
    %844 = vmatmul.mubr.f32.gmra.mxu0 %v772
    %v845 = vpop.f32.mrf.mxu0
    %v846 = vadd.f32 %v766, %v845
    %v847 = vpop.f32.mrf.mxu0
    %848 = vdwg.mxu0
    %849 = vst.msk [vmem:[#allocation14] sm:$0xff] %vm151, %v841
    %850 = vst.msk [vmem:[#allocation14 + $0x8] sm:$0xff] %vm151, %v846
    %851 = vst.msk [vmem:[#allocation15] sm:$0xff] %vm562, %v609
    %852 = vst.msk [vmem:[#allocation15 + $0x8] sm:$0xff] %vm562, %v610
    // Predicated region
    $region70: #{tpu_custom_call.1} parent=1 // pred_check
      _
    $region71: #{tpu_custom_call.1} parent=1 // pred_check_branch
      %854 = sbr.rel (0) target = $region73
    $region72: #{tpu_custom_call.1} parent=1 // pred_region
      %s856 = ssub.s32 256, 256
      %857 = vsyncadd [#allocation4], %s856
      %s858 = sshll.u32 [#allocation14], 4
      %s859 = int_to_ptr.vmem [resolvable:$true] %s858
      %864 = dma.vmem_to_hbm [thread:$0]  %s859, 256, %s10, [#allocation4], 128, 128, 8
    $region73: #{tpu_custom_call.1} parent=1 // pred_fallthru
      _
    // Predicated region
    $region74: #{tpu_custom_call.1} parent=1 // pred_check
      _
    $region75: #{tpu_custom_call.1} parent=1 // pred_check_branch
      %866 = sbr.rel (0) target = $region77
    $region76: #{tpu_custom_call.1} parent=1 // pred_region
      %s868 = ssub.s32 256, 256
      %869 = vsyncadd [#allocation16], %s868
      %s870 = sshll.u32 [#allocation15], 4
      %s871 = int_to_ptr.vmem [resolvable:$true] %s870
      %876 = dma.vmem_to_hbm [thread:$0]  %s871, 256, %s11, [#allocation16], 128, 128, 8
    $region77: #{tpu_custom_call.1} parent=1 // pred_fallthru
      _
    // Predicated region
    $region78: #{tpu_custom_call.1} parent=1 // pred_check
      _
    $region79: #{tpu_custom_call.1} parent=1 // pred_check_branch
      %878 = sbr.rel (0) target = $region81
    $region80: #{tpu_custom_call.1} parent=1 // pred_region
      %879 = dma.done [#allocation4], 256
    $region81: #{tpu_custom_call.1} parent=1 // pred_fallthru
      _
    // Predicated region
    $region82: #{tpu_custom_call.1} parent=1 // pred_check
      _
    $region83: #{tpu_custom_call.1} parent=1 // pred_check_branch
      %881 = sbr.rel (0) target = $region85
    $region84: #{tpu_custom_call.1} parent=1 // pred_region
      %882 = dma.done [#allocation16], 256
    $region85: #{tpu_custom_call.1} parent=1 // pred_fallthru
      _
    %883 = vsyncpa [#allocation3], 1
    %884 = vsyncpa [#allocation6], 1
    %885 = vsyncpa [#allocation9], 1
    %886 = vsyncpa [#allocation12], 1
    %887 = vsyncpa [#allocation4], 1
    %888 = vsyncpa [#allocation16], 1

// kernel: tpu_custom_call.1
$region0: #{tpu_custom_call.1}
  #allocation0 [shape = 'u32[]', space=smem, size = 0x4, offset = 0x4, fixed_abs, tag = 'smem constant byte address 0x4 - core index']
  #allocation1 [shape = 'u32[144,128]{1,0:T(1,128)}', space=vmem, size = 0x12000, scoped, tag = 'internal scratch']
  %s0 = inlined_call_operand.hbm [shape: f32[2,8,32], index: 0, kind: input, shape index: {}]
  %s1 = inlined_call_operand.hbm [shape: f32[2,8,32], index: 1, kind: input, shape index: {}]
  %s2 = inlined_call_operand.hbm [shape: f32[2,8,32], index: 2, kind: input, shape index: {}]
  %s3 = inlined_call_operand.hbm [shape: f32[32,32], index: 3, kind: input, shape index: {}]
  %s4 = inlined_call_operand.vmem [shape: f32[1,32], index: 4, kind: input, shape index: {}]
  %s5 = inlined_call_operand.hbm [shape: f32[32,32], index: 5, kind: input, shape index: {}]
  %s6 = inlined_call_operand.vmem [shape: f32[1,32], index: 6, kind: input, shape index: {}]
  %s7 = inlined_call_operand.hbm [shape: f32[32,32], index: 7, kind: input, shape index: {}]
  %s8 = inlined_call_operand.hbm [shape: f32[32,32], index: 8, kind: input, shape index: {}]
  %s9 = inlined_call_operand.vmem [shape: f32[1,32], index: 9, kind: input, shape index: {}]
  %s10 = inlined_call_operand.hbm [shape: f32[2,8,32], index: 10, kind: output, shape index: {0}]
  %s11 = inlined_call_operand.hbm [shape: f32[2,8,8], index: 11, kind: output, shape index: {1}]
  %12 = xla_tuple %s10, %s11
  %s13 = sld [smem:[#allocation0]]
  $region86: #{tpu_custom_call.1} parent=0
    _
  %s15 = ssub.s32 1, %s13
  %s16 = scalar_select 0, %s15, %s13
  $region1: #{tpu_custom_call.1} parent=0
    #allocation2 [shape = 'u8[8192]{0}', space=vmem, size = 0x2000, scoped, tag = 'input window, operand 0, single buffered']
    #allocation3 [shape = 's32[1]{0}', space=sflag, size = 0x4, scoped, tag = 'scoped memory for tpu_custom_call.1']
    #allocation4 [shape = 's32[1]{0}', space=sflag, size = 0x4, scoped, tag = 'scoped memory for tpu_custom_call.1']
    #allocation5 [shape = 'u8[8192]{0}', space=vmem, size = 0x2000, scoped, tag = 'input window, operand 1, single buffered']
    #allocation6 [shape = 's32[1]{0}', space=sflag, size = 0x4, scoped, tag = 'scoped memory for tpu_custom_call.1']
    #allocation7 [shape = 'u8[8192]{0}', space=vmem, size = 0x2000, scoped, tag = 'input window, operand 2, single buffered']
    #allocation8 [shape = 'u8[16384]{0}', space=vmem, size = 0x4000, scoped, tag = 'input window, operand 3, single buffered']
    #allocation9 [shape = 's32[1]{0}', space=sflag, size = 0x4, scoped, tag = 'scoped memory for tpu_custom_call.1']
    #allocation10 [shape = 'u8[16384]{0}', space=vmem, size = 0x4000, scoped, tag = 'input window, operand 5, single buffered']
    #allocation11 [shape = 'u8[16384]{0}', space=vmem, size = 0x4000, scoped, tag = 'input window, operand 7, single buffered']
    #allocation12 [shape = 's32[1]{0}', space=sflag, size = 0x4, scoped, tag = 'scoped memory for tpu_custom_call.1']
    #allocation13 [shape = 'u8[16384]{0}', space=vmem, size = 0x4000, scoped, tag = 'input window, operand 8, single buffered']
    #allocation14 [shape = 'u8[8192]{0}', space=vmem, size = 0x2000, scoped, tag = 'output window, operand 0, single buffered']
    #allocation15 [shape = 'u8[8192]{0}', space=vmem, size = 0x2000, scoped, tag = 'output window, operand 1, single buffered']
    #allocation16 [shape = 's32[1]{0}', space=sflag, size = 0x4, scoped, tag = 'scoped memory for tpu_custom_call.1']
    %17 = vsyncpa [#allocation3], 0
    %18 = vsyncpa [#allocation6], 0
    %19 = vsyncpa [#allocation9], 0
    %20 = vsyncpa [#allocation12], 0
    %21 = vsyncpa [#allocation4], 0
    %22 = vsyncpa [#allocation16], 0
    // Predicated region
    $region2: #{tpu_custom_call.1} parent=1 // pred_check
      _
    $region3: #{tpu_custom_call.1} parent=1 // pred_check_branch
      %24 = sbr.rel (0) target = $region5
    $region4: #{tpu_custom_call.1} parent=1 // pred_region
      %s26 = ssub.s32 256, 256
      %27 = vsyncadd [#allocation3], %s26
      %s28 = sshll.u32 [#allocation2], 4
      %s29 = int_to_ptr.vmem [resolvable:$true] %s28
      %34 = dma.hbm_to_vmem [thread:$0]  %s0, 256, %s29, [#allocation3], 128, 128, 8
    $region5: #{tpu_custom_call.1} parent=1 // pred_fallthru
      _
    // Predicated region
    $region6: #{tpu_custom_call.1} parent=1 // pred_check
      _
    $region7: #{tpu_custom_call.1} parent=1 // pred_check_branch
      %36 = sbr.rel (0) target = $region9
    $region8: #{tpu_custom_call.1} parent=1 // pred_region
      %s38 = ssub.s32 256, 256
      %39 = vsyncadd [#allocation6], %s38
      %s40 = sshll.u32 [#allocation5], 4
      %s41 = int_to_ptr.vmem [resolvable:$true] %s40
      %46 = dma.hbm_to_vmem [thread:$0]  %s1, 256, %s41, [#allocation6], 128, 128, 8
    $region9: #{tpu_custom_call.1} parent=1 // pred_fallthru
      _
    // Predicated region
    $region10: #{tpu_custom_call.1} parent=1 // pred_check
      _
    $region11: #{tpu_custom_call.1} parent=1 // pred_check_branch
      %48 = sbr.rel (0) target = $region13
    $region12: #{tpu_custom_call.1} parent=1 // pred_region
      %s50 = ssub.s32 256, 256
      %51 = vsyncadd [#allocation6], %s50
      %s52 = sshll.u32 [#allocation7], 4
      %s53 = int_to_ptr.vmem [resolvable:$true] %s52
      %58 = dma.hbm_to_vmem [thread:$0]  %s2, 256, %s53, [#allocation6], 128, 128, 8
    $region13: #{tpu_custom_call.1} parent=1 // pred_fallthru
      _
    // Predicated region
    $region14: #{tpu_custom_call.1} parent=1 // pred_check
      _
    $region15: #{tpu_custom_call.1} parent=1 // pred_check_branch
      %60 = sbr.rel (0) target = $region17
    $region16: #{tpu_custom_call.1} parent=1 // pred_region
      %s62 = ssub.s32 512, 512
      %63 = vsyncadd [#allocation9], %s62
      %s64 = sshll.u32 [#allocation8], 4
      %s65 = int_to_ptr.vmem [resolvable:$true] %s64
      %70 = dma.hbm_to_vmem [thread:$0]  %s3, 512, %s65, [#allocation9], 128, 128, 8
    $region17: #{tpu_custom_call.1} parent=1 // pred_fallthru
      _
    // Predicated region
    $region18: #{tpu_custom_call.1} parent=1 // pred_check
      _
    $region19: #{tpu_custom_call.1} parent=1 // pred_check_branch
      %72 = sbr.rel (0) target = $region21
    $region20: #{tpu_custom_call.1} parent=1 // pred_region
      _
    $region21: #{tpu_custom_call.1} parent=1 // pred_fallthru
      _
    // Predicated region
    $region22: #{tpu_custom_call.1} parent=1 // pred_check
      _
    $region23: #{tpu_custom_call.1} parent=1 // pred_check_branch
      %74 = sbr.rel (0) target = $region25
    $region24: #{tpu_custom_call.1} parent=1 // pred_region
      %s76 = ssub.s32 512, 512
      %77 = vsyncadd [#allocation9], %s76
      %s78 = sshll.u32 [#allocation10], 4
      %s79 = int_to_ptr.vmem [resolvable:$true] %s78
      %84 = dma.hbm_to_vmem [thread:$0]  %s5, 512, %s79, [#allocation9], 128, 128, 8
    $region25: #{tpu_custom_call.1} parent=1 // pred_fallthru
      _
    // Predicated region
    $region26: #{tpu_custom_call.1} parent=1 // pred_check
      _
    $region27: #{tpu_custom_call.1} parent=1 // pred_check_branch
      %86 = sbr.rel (0) target = $region29
    $region28: #{tpu_custom_call.1} parent=1 // pred_region
      _
    $region29: #{tpu_custom_call.1} parent=1 // pred_fallthru
      _
    // Predicated region
    $region30: #{tpu_custom_call.1} parent=1 // pred_check
      _
    $region31: #{tpu_custom_call.1} parent=1 // pred_check_branch
      %88 = sbr.rel (0) target = $region33
    $region32: #{tpu_custom_call.1} parent=1 // pred_region
      %s90 = ssub.s32 512, 512
      %91 = vsyncadd [#allocation12], %s90
      %s92 = sshll.u32 [#allocation11], 4
      %s93 = int_to_ptr.vmem [resolvable:$true] %s92
      %98 = dma.hbm_to_vmem [thread:$0]  %s7, 512, %s93, [#allocation12], 128, 128, 8
    $region33: #{tpu_custom_call.1} parent=1 // pred_fallthru
      _
    // Predicated region
    $region34: #{tpu_custom_call.1} parent=1 // pred_check
      _
    $region35: #{tpu_custom_call.1} parent=1 // pred_check_branch
      %100 = sbr.rel (0) target = $region37
    $region36: #{tpu_custom_call.1} parent=1 // pred_region
      %s102 = ssub.s32 512, 512
      %103 = vsyncadd [#allocation12], %s102
      %s104 = sshll.u32 [#allocation13], 4
      %s105 = int_to_ptr.vmem [resolvable:$true] %s104
      %110 = dma.hbm_to_vmem [thread:$0]  %s8, 512, %s105, [#allocation12], 128, 128, 8
    $region37: #{tpu_custom_call.1} parent=1 // pred_fallthru
      _
    // Predicated region
    $region38: #{tpu_custom_call.1} parent=1 // pred_check
      _
    $region39: #{tpu_custom_call.1} parent=1 // pred_check_branch
      %112 = sbr.rel (0) target = $region41
    $region40: #{tpu_custom_call.1} parent=1 // pred_region
      _
    $region41: #{tpu_custom_call.1} parent=1 // pred_fallthru
      _
    // Predicated region
    $region42: #{tpu_custom_call.1} parent=1 // pred_check
      _
    $region43: #{tpu_custom_call.1} parent=1 // pred_check_branch
      %114 = sbr.rel (0) target = $region45
    $region44: #{tpu_custom_call.1} parent=1 // pred_region
      %115 = dma.done [#allocation3], 256
    $region45: #{tpu_custom_call.1} parent=1 // pred_fallthru
      _
    // Predicated region
    $region46: #{tpu_custom_call.1} parent=1 // pred_check
      _
    $region47: #{tpu_custom_call.1} parent=1 // pred_check_branch
      %117 = sbr.rel (0) target = $region49
    $region48: #{tpu_custom_call.1} parent=1 // pred_region
      %118 = dma.done [#allocation6], 256
    $region49: #{tpu_custom_call.1} parent=1 // pred_fallthru
      _
    // Predicated region
    $region50: #{tpu_custom_call.1} parent=1 // pred_check
      _
    $region51: #{tpu_custom_call.1} parent=1 // pred_check_branch
      %120 = sbr.rel (0) target = $region53
    $region52: #{tpu_custom_call.1} parent=1 // pred_region
      %121 = dma.done [#allocation6], 256
    $region53: #{tpu_custom_call.1} parent=1 // pred_fallthru
      _
    // Predicated region
    $region54: #{tpu_custom_call.1} parent=1 // pred_check
      _
    $region55: #{tpu_custom_call.1} parent=1 // pred_check_branch
      %123 = sbr.rel (0) target = $region57
    $region56: #{tpu_custom_call.1} parent=1 // pred_region
      %124 = dma.done [#allocation9], 512
    $region57: #{tpu_custom_call.1} parent=1 // pred_fallthru
      _
    // Predicated region
    $region58: #{tpu_custom_call.1} parent=1 // pred_check
      _
    $region59: #{tpu_custom_call.1} parent=1 // pred_check_branch
      %126 = sbr.rel (0) target = $region61
    $region60: #{tpu_custom_call.1} parent=1 // pred_region
      %127 = dma.done [#allocation9], 512
    $region61: #{tpu_custom_call.1} parent=1 // pred_fallthru
      _
    // Predicated region
    $region62: #{tpu_custom_call.1} parent=1 // pred_check
      _
    $region63: #{tpu_custom_call.1} parent=1 // pred_check_branch
      %129 = sbr.rel (0) target = $region65
    $region64: #{tpu_custom_call.1} parent=1 // pred_region
      %130 = dma.done [#allocation12], 512
    $region65: #{tpu_custom_call.1} parent=1 // pred_fallthru
      _
    // Predicated region
    $region66: #{tpu_custom_call.1} parent=1 // pred_check
      _
    $region67: #{tpu_custom_call.1} parent=1 // pred_check_branch
      %132 = sbr.rel (0) target = $region69
    $region68: #{tpu_custom_call.1} parent=1 // pred_region
      %133 = dma.done [#allocation12], 512
    $region69: #{tpu_custom_call.1} parent=1 // pred_fallthru
      _
    %v134 = vld [vmem:[#allocation2] sm:$0xff]
    %v135 = vld [vmem:[#allocation2 + $0x8] sm:$0xff]
    %v136 = vld [vmem:[#allocation5] sm:$0xff]
    %v137 = vld [vmem:[#allocation5 + $0x8] sm:$0xff]
    %v138 = vld [vmem:[#allocation7] sm:$0xff]
    %v139 = vld [vmem:[#allocation7 + $0x8] sm:$0xff]
    %v140 = vld [vmem:[#allocation8] sm:$0xff]
    %v141 = vld [vmem:[#allocation8 + $0x8] sm:$0xff]
    %v142 = vld [vmem:[#allocation8 + $0x10] sm:$0xff]
    %v143 = vld [vmem:[#allocation8 + $0x18] sm:$0xff]
    %v144 = vld [vmem:[%s4] sm:$0x1]
    %v146 = vlaneseq
    %v147 = vshrl.u32 %v146, 7
    %v148 = vsub.s32 0, %v147
    %v149 = vrot.slane %v144, %v148
    %vm151 = vcmask 261120
    %v153 = vsel %vm151, %v134, 0
    %v156 = vsel %vm151, %v135, 0
    %158 = vmatprep.subr.mxu0 0.0
    %159 = vmatpush1.msra.mxu0 0.0
    %160 = vmatprep.subr.mxu0 0.0
    %161 = vmatpush1.msra.mxu0 0.0
    %162 = vmatprep.subr.mxu0 0.0
    %163 = vmatpush1.msra.mxu0 0.0
    %164 = vmatprep.subr.mxu0 0.0
    %165 = vmatpush1.msra.mxu0 0.0
    %166 = vmatprep.subr.mxu0 0.0
    %167 = vmatpush1.msra.mxu0 0.0
    %168 = vmatprep.subr.mxu0 0.0
    %169 = vmatpush1.msra.mxu0 0.0
    %170 = vmatprep.subr.mxu0 0.0
    %171 = vmatpush1.msra.mxu0 0.0
    %172 = vmatprep.subr.mxu0 0.0
    %173 = vmatpush1.msra.mxu0 0.0
    %174 = vmatprep.subr.mxu0 0.0
    %175 = vmatpush1.msra.mxu0 0.0
    %176 = vmatprep.subr.mxu0 0.0
    %177 = vmatpush1.msra.mxu0 0.0
    %178 = vmatprep.subr.mxu0 0.0
    %179 = vmatpush1.msra.mxu0 0.0
    %180 = vmatprep.subr.mxu0 0.0
    %181 = vmatpush1.msra.mxu0 0.0
    %182 = vmatprep.subr.mxu0 0.0
    %183 = vmatpush1.msra.mxu0 %v143
    %184 = vmatprep.subr.mxu0 0.0
    %185 = vmatpush1.msra.mxu0 %v142
    %186 = vmatprep.subr.mxu0 0.0
    %187 = vmatpush1.msra.mxu0 %v141
    %188 = vmatprep.subr.mxu0 0.0
    %189 = vmatpush1.msra.mxu0 %v140
    %190 = vmatprep.subr.mxu0 0.0
    %191 = vmatpush2.msra.mxu0 0.0
    %192 = vmatprep.subr.mxu0 0.0
    %193 = vmatpush2.msra.mxu0 0.0
    %194 = vmatprep.subr.mxu0 0.0
    %195 = vmatpush2.msra.mxu0 0.0
    %196 = vmatprep.subr.mxu0 0.0
    %197 = vmatpush2.msra.mxu0 0.0
    %198 = vmatprep.subr.mxu0 0.0
    %199 = vmatpush2.msra.mxu0 0.0
    %200 = vmatprep.subr.mxu0 0.0
    %201 = vmatpush2.msra.mxu0 0.0
    %202 = vmatprep.subr.mxu0 0.0
    %203 = vmatpush2.msra.mxu0 0.0
    %204 = vmatprep.subr.mxu0 0.0
    %205 = vmatpush2.msra.mxu0 0.0
    %206 = vmatprep.subr.mxu0 0.0
    %207 = vmatpush2.msra.mxu0 0.0
    %208 = vmatprep.subr.mxu0 0.0
    %209 = vmatpush2.msra.mxu0 0.0
    %210 = vmatprep.subr.mxu0 0.0
    %211 = vmatpush2.msra.mxu0 0.0
    %212 = vmatprep.subr.mxu0 0.0
    %213 = vmatpush2.msra.mxu0 0.0
    %214 = vmatprep.subr.mxu0 0.0
    %215 = vmatpush2.msra.mxu0 0.0
    %216 = vmatprep.subr.mxu0 0.0
    %217 = vmatpush2.msra.mxu0 0.0
    %218 = vmatprep.subr.mxu0 0.0
    %219 = vmatpush2.msra.mxu0 0.0
    %220 = vmatprep.subr.mxu0 0.0
    %221 = vmatpush2.msra.mxu0 0.0
    %222 = vmatprep.mubr.f32.mxu0 0.0
    %223 = vmatmul.mubr.f32.gmra.mxu0 %v153
    %v224 = vpop.f32.mrf.mxu0
    %v225 = vadd.f32 %v149, %v224
    %v226 = vpop.f32.mrf.mxu0
    %227 = vmatprep.mubr.f32.mxu0 0.0
    %228 = vmatmul.mubr.f32.gmra.mxu0 %v156
    %v229 = vpop.f32.mrf.mxu0
    %v230 = vadd.f32 %v149, %v229
    %v231 = vpop.f32.mrf.mxu0
    %232 = vdwg.mxu0
    %v233 = vld [vmem:[#allocation10] sm:$0xff]
    %v234 = vld [vmem:[#allocation10 + $0x8] sm:$0xff]
    %v235 = vld [vmem:[#allocation10 + $0x10] sm:$0xff]
    %v236 = vld [vmem:[#allocation10 + $0x18] sm:$0xff]
    %v237 = vld [vmem:[%s6] sm:$0x1]
    %v239 = vlaneseq
    %v240 = vshrl.u32 %v239, 7
    %v241 = vsub.s32 0, %v240
    %v242 = vrot.slane %v237, %v241
    %v245 = vsel %vm151, %v136, 0
    %v248 = vsel %vm151, %v137, 0
    %250 = vmatprep.subr.mxu0 0.0
    %251 = vmatpush1.msra.mxu0 0.0
    %252 = vmatprep.subr.mxu0 0.0
    %253 = vmatpush1.msra.mxu0 0.0
    %254 = vmatprep.subr.mxu0 0.0
    %255 = vmatpush1.msra.mxu0 0.0
    %256 = vmatprep.subr.mxu0 0.0
    %257 = vmatpush1.msra.mxu0 0.0
    %258 = vmatprep.subr.mxu0 0.0
    %259 = vmatpush1.msra.mxu0 0.0
    %260 = vmatprep.subr.mxu0 0.0
    %261 = vmatpush1.msra.mxu0 0.0
    %262 = vmatprep.subr.mxu0 0.0
    %263 = vmatpush1.msra.mxu0 0.0
    %264 = vmatprep.subr.mxu0 0.0
    %265 = vmatpush1.msra.mxu0 0.0
    %266 = vmatprep.subr.mxu0 0.0
    %267 = vmatpush1.msra.mxu0 0.0
    %268 = vmatprep.subr.mxu0 0.0
    %269 = vmatpush1.msra.mxu0 0.0
    %270 = vmatprep.subr.mxu0 0.0
    %271 = vmatpush1.msra.mxu0 0.0
    %272 = vmatprep.subr.mxu0 0.0
    %273 = vmatpush1.msra.mxu0 0.0
    %274 = vmatprep.subr.mxu0 0.0
    %275 = vmatpush1.msra.mxu0 %v236
    %276 = vmatprep.subr.mxu0 0.0
    %277 = vmatpush1.msra.mxu0 %v235
    %278 = vmatprep.subr.mxu0 0.0
    %279 = vmatpush1.msra.mxu0 %v234
    %280 = vmatprep.subr.mxu0 0.0
    %281 = vmatpush1.msra.mxu0 %v233
    %282 = vmatprep.subr.mxu0 0.0
    %283 = vmatpush2.msra.mxu0 0.0
    %284 = vmatprep.subr.mxu0 0.0
    %285 = vmatpush2.msra.mxu0 0.0
    %286 = vmatprep.subr.mxu0 0.0
    %287 = vmatpush2.msra.mxu0 0.0
    %288 = vmatprep.subr.mxu0 0.0
    %289 = vmatpush2.msra.mxu0 0.0
    %290 = vmatprep.subr.mxu0 0.0
    %291 = vmatpush2.msra.mxu0 0.0
    %292 = vmatprep.subr.mxu0 0.0
    %293 = vmatpush2.msra.mxu0 0.0
    %294 = vmatprep.subr.mxu0 0.0
    %295 = vmatpush2.msra.mxu0 0.0
    %296 = vmatprep.subr.mxu0 0.0
    %297 = vmatpush2.msra.mxu0 0.0
    %298 = vmatprep.subr.mxu0 0.0
    %299 = vmatpush2.msra.mxu0 0.0
    %300 = vmatprep.subr.mxu0 0.0
    %301 = vmatpush2.msra.mxu0 0.0
    %302 = vmatprep.subr.mxu0 0.0
    %303 = vmatpush2.msra.mxu0 0.0
    %304 = vmatprep.subr.mxu0 0.0
    %305 = vmatpush2.msra.mxu0 0.0
    %306 = vmatprep.subr.mxu0 0.0
    %307 = vmatpush2.msra.mxu0 0.0
    %308 = vmatprep.subr.mxu0 0.0
    %309 = vmatpush2.msra.mxu0 0.0
    %310 = vmatprep.subr.mxu0 0.0
    %311 = vmatpush2.msra.mxu0 0.0
    %312 = vmatprep.subr.mxu0 0.0
    %313 = vmatpush2.msra.mxu0 0.0
    %314 = vmatprep.mubr.f32.mxu0 0.0
    %315 = vmatmul.mubr.f32.gmra.mxu0 %v245
    %v316 = vpop.f32.mrf.mxu0
    %v317 = vadd.f32 %v242, %v316
    %v318 = vpop.f32.mrf.mxu0
    %319 = vmatprep.mubr.f32.mxu0 0.0
    %320 = vmatmul.mubr.f32.gmra.mxu0 %v248
    %v321 = vpop.f32.mrf.mxu0
    %v322 = vadd.f32 %v242, %v321
    %v323 = vpop.f32.mrf.mxu0
    %324 = vdwg.mxu0
    %v325 = vld [vmem:[#allocation11] sm:$0xff]
    %v326 = vld [vmem:[#allocation11 + $0x8] sm:$0xff]
    %v327 = vld [vmem:[#allocation11 + $0x10] sm:$0xff]
    %v328 = vld [vmem:[#allocation11 + $0x18] sm:$0xff]
    %v330 = vsel %vm151, %v138, 0
    %v333 = vsel %vm151, %v139, 0
    %335 = vmatprep.subr.mxu0 0.0
    %336 = vmatpush1.msra.mxu0 0.0
    %337 = vmatprep.subr.mxu0 0.0
    %338 = vmatpush1.msra.mxu0 0.0
    %339 = vmatprep.subr.mxu0 0.0
    %340 = vmatpush1.msra.mxu0 0.0
    %341 = vmatprep.subr.mxu0 0.0
    %342 = vmatpush1.msra.mxu0 0.0
    %343 = vmatprep.subr.mxu0 0.0
    %344 = vmatpush1.msra.mxu0 0.0
    %345 = vmatprep.subr.mxu0 0.0
    %346 = vmatpush1.msra.mxu0 0.0
    %347 = vmatprep.subr.mxu0 0.0
    %348 = vmatpush1.msra.mxu0 0.0
    %349 = vmatprep.subr.mxu0 0.0
    %350 = vmatpush1.msra.mxu0 0.0
    %351 = vmatprep.subr.mxu0 0.0
    %352 = vmatpush1.msra.mxu0 0.0
    %353 = vmatprep.subr.mxu0 0.0
    %354 = vmatpush1.msra.mxu0 0.0
    %355 = vmatprep.subr.mxu0 0.0
    %356 = vmatpush1.msra.mxu0 0.0
    %357 = vmatprep.subr.mxu0 0.0
    %358 = vmatpush1.msra.mxu0 0.0
    %359 = vmatprep.subr.mxu0 0.0
    %360 = vmatpush1.msra.mxu0 %v328
    %361 = vmatprep.subr.mxu0 0.0
    %362 = vmatpush1.msra.mxu0 %v327
    %363 = vmatprep.subr.mxu0 0.0
    %364 = vmatpush1.msra.mxu0 %v326
    %365 = vmatprep.subr.mxu0 0.0
    %366 = vmatpush1.msra.mxu0 %v325
    %367 = vmatprep.subr.mxu0 0.0
    %368 = vmatpush2.msra.mxu0 0.0
    %369 = vmatprep.subr.mxu0 0.0
    %370 = vmatpush2.msra.mxu0 0.0
    %371 = vmatprep.subr.mxu0 0.0
    %372 = vmatpush2.msra.mxu0 0.0
    %373 = vmatprep.subr.mxu0 0.0
    %374 = vmatpush2.msra.mxu0 0.0
    %375 = vmatprep.subr.mxu0 0.0
    %376 = vmatpush2.msra.mxu0 0.0
    %377 = vmatprep.subr.mxu0 0.0
    %378 = vmatpush2.msra.mxu0 0.0
    %379 = vmatprep.subr.mxu0 0.0
    %380 = vmatpush2.msra.mxu0 0.0
    %381 = vmatprep.subr.mxu0 0.0
    %382 = vmatpush2.msra.mxu0 0.0
    %383 = vmatprep.subr.mxu0 0.0
    %384 = vmatpush2.msra.mxu0 0.0
    %385 = vmatprep.subr.mxu0 0.0
    %386 = vmatpush2.msra.mxu0 0.0
    %387 = vmatprep.subr.mxu0 0.0
    %388 = vmatpush2.msra.mxu0 0.0
    %389 = vmatprep.subr.mxu0 0.0
    %390 = vmatpush2.msra.mxu0 0.0
    %391 = vmatprep.subr.mxu0 0.0
    %392 = vmatpush2.msra.mxu0 0.0
    %393 = vmatprep.subr.mxu0 0.0
    %394 = vmatpush2.msra.mxu0 0.0
    %395 = vmatprep.subr.mxu0 0.0
    %396 = vmatpush2.msra.mxu0 0.0
    %397 = vmatprep.subr.mxu0 0.0
    %398 = vmatpush2.msra.mxu0 0.0
    %399 = vmatprep.mubr.f32.mxu0 0.0
    %400 = vmatmul.mubr.f32.gmra.mxu0 %v330
    %v401 = vpop.f32.mrf.mxu0
    %v402 = vadd.f32 0.0, %v401
    %v403 = vpop.f32.mrf.mxu0
    %404 = vmatprep.mubr.f32.mxu0 0.0
    %405 = vmatmul.mubr.f32.gmra.mxu0 %v333
    %v406 = vpop.f32.mrf.mxu0
    %v407 = vadd.f32 0.0, %v406
    %v408 = vpop.f32.mrf.mxu0
    %409 = vdwg.mxu0
    %v411 = vsel %vm151, %v225, 0
    %v414 = vsel %vm151, %v317, 0
    %416 = vmatprep.subr.mxu0 0.0
    %417 = vmatpush1.xpose.msra.mxu0 0.0
    %418 = vmatprep.subr.mxu0 0.0
    %419 = vmatpush1.xpose.msra.mxu0 0.0
    %420 = vmatprep.subr.mxu0 0.0
    %421 = vmatpush1.xpose.msra.mxu0 0.0
    %422 = vmatprep.subr.mxu0 0.0
    %423 = vmatpush1.xpose.msra.mxu0 0.0
    %424 = vmatprep.subr.mxu0 0.0
    %425 = vmatpush1.xpose.msra.mxu0 0.0
    %426 = vmatprep.subr.mxu0 0.0
    %427 = vmatpush1.xpose.msra.mxu0 0.0
    %428 = vmatprep.subr.mxu0 0.0
    %429 = vmatpush1.xpose.msra.mxu0 0.0
    %430 = vmatprep.subr.mxu0 0.0
    %431 = vmatpush1.xpose.msra.mxu0 0.0
    %432 = vmatprep.subr.mxu0 0.0
    %433 = vmatpush1.xpose.msra.mxu0 0.0
    %434 = vmatprep.subr.mxu0 0.0
    %435 = vmatpush1.xpose.msra.mxu0 0.0
    %436 = vmatprep.subr.mxu0 0.0
    %437 = vmatpush1.xpose.msra.mxu0 0.0
    %438 = vmatprep.subr.mxu0 0.0
    %439 = vmatpush1.xpose.msra.mxu0 0.0
    %440 = vmatprep.subr.mxu0 0.0
    %441 = vmatpush1.xpose.msra.mxu0 0.0
    %442 = vmatprep.subr.mxu0 0.0
    %443 = vmatpush1.xpose.msra.mxu0 0.0
    %444 = vmatprep.subr.mxu0 0.0
    %445 = vmatpush1.xpose.msra.mxu0 0.0
    %446 = vmatprep.subr.mxu0 0.0
    %447 = vmatpush1.xpose.msra.mxu0 %v414
    %448 = vmatprep.subr.mxu0 0.0
    %449 = vmatpush2.xpose.msra.mxu0 0.0
    %450 = vmatprep.subr.mxu0 0.0
    %451 = vmatpush2.xpose.msra.mxu0 0.0
    %452 = vmatprep.subr.mxu0 0.0
    %453 = vmatpush2.xpose.msra.mxu0 0.0
    %454 = vmatprep.subr.mxu0 0.0
    %455 = vmatpush2.xpose.msra.mxu0 0.0
    %456 = vmatprep.subr.mxu0 0.0
    %457 = vmatpush2.xpose.msra.mxu0 0.0
    %458 = vmatprep.subr.mxu0 0.0
    %459 = vmatpush2.xpose.msra.mxu0 0.0
    %460 = vmatprep.subr.mxu0 0.0
    %461 = vmatpush2.xpose.msra.mxu0 0.0
    %462 = vmatprep.subr.mxu0 0.0
    %463 = vmatpush2.xpose.msra.mxu0 0.0
    %464 = vmatprep.subr.mxu0 0.0
    %465 = vmatpush2.xpose.msra.mxu0 0.0
    %466 = vmatprep.subr.mxu0 0.0
    %467 = vmatpush2.xpose.msra.mxu0 0.0
    %468 = vmatprep.subr.mxu0 0.0
    %469 = vmatpush2.xpose.msra.mxu0 0.0
    %470 = vmatprep.subr.mxu0 0.0
    %471 = vmatpush2.xpose.msra.mxu0 0.0
    %472 = vmatprep.subr.mxu0 0.0
    %473 = vmatpush2.xpose.msra.mxu0 0.0
    %474 = vmatprep.subr.mxu0 0.0
    %475 = vmatpush2.xpose.msra.mxu0 0.0
    %476 = vmatprep.subr.mxu0 0.0
    %477 = vmatpush2.xpose.msra.mxu0 0.0
    %478 = vmatprep.subr.mxu0 0.0
    %479 = vmatpush2.xpose.msra.mxu0 0.0
    %480 = vmatprep.mubr.f32.mxu0 0.0
    %481 = vmatmul.mubr.f32.gmra.mxu0 %v411
    %v482 = vpop.f32.mrf.mxu0
    %v483 = vadd.f32 0.0, %v482
    %v484 = vpop.f32.mrf.mxu0
    %485 = vdwg.mxu0
    %v487 = vsel %vm151, %v230, 0
    %v490 = vsel %vm151, %v322, 0
    %492 = vmatprep.subr.mxu0 0.0
    %493 = vmatpush1.xpose.msra.mxu0 0.0
    %494 = vmatprep.subr.mxu0 0.0
    %495 = vmatpush1.xpose.msra.mxu0 0.0
    %496 = vmatprep.subr.mxu0 0.0
    %497 = vmatpush1.xpose.msra.mxu0 0.0
    %498 = vmatprep.subr.mxu0 0.0
    %499 = vmatpush1.xpose.msra.mxu0 0.0
    %500 = vmatprep.subr.mxu0 0.0
    %501 = vmatpush1.xpose.msra.mxu0 0.0
    %502 = vmatprep.subr.mxu0 0.0
    %503 = vmatpush1.xpose.msra.mxu0 0.0
    %504 = vmatprep.subr.mxu0 0.0
    %505 = vmatpush1.xpose.msra.mxu0 0.0
    %506 = vmatprep.subr.mxu0 0.0
    %507 = vmatpush1.xpose.msra.mxu0 0.0
    %508 = vmatprep.subr.mxu0 0.0
    %509 = vmatpush1.xpose.msra.mxu0 0.0
    %510 = vmatprep.subr.mxu0 0.0
    %511 = vmatpush1.xpose.msra.mxu0 0.0
    %512 = vmatprep.subr.mxu0 0.0
    %513 = vmatpush1.xpose.msra.mxu0 0.0
    %514 = vmatprep.subr.mxu0 0.0
    %515 = vmatpush1.xpose.msra.mxu0 0.0
    %516 = vmatprep.subr.mxu0 0.0
    %517 = vmatpush1.xpose.msra.mxu0 0.0
    %518 = vmatprep.subr.mxu0 0.0
    %519 = vmatpush1.xpose.msra.mxu0 0.0
    %520 = vmatprep.subr.mxu0 0.0
    %521 = vmatpush1.xpose.msra.mxu0 0.0
    %522 = vmatprep.subr.mxu0 0.0
    %523 = vmatpush1.xpose.msra.mxu0 %v490
    %524 = vmatprep.subr.mxu0 0.0
    %525 = vmatpush2.xpose.msra.mxu0 0.0
    %526 = vmatprep.subr.mxu0 0.0
    %527 = vmatpush2.xpose.msra.mxu0 0.0
    %528 = vmatprep.subr.mxu0 0.0
    %529 = vmatpush2.xpose.msra.mxu0 0.0
    %530 = vmatprep.subr.mxu0 0.0
    %531 = vmatpush2.xpose.msra.mxu0 0.0
    %532 = vmatprep.subr.mxu0 0.0
    %533 = vmatpush2.xpose.msra.mxu0 0.0
    %534 = vmatprep.subr.mxu0 0.0
    %535 = vmatpush2.xpose.msra.mxu0 0.0
    %536 = vmatprep.subr.mxu0 0.0
    %537 = vmatpush2.xpose.msra.mxu0 0.0
    %538 = vmatprep.subr.mxu0 0.0
    %539 = vmatpush2.xpose.msra.mxu0 0.0
    %540 = vmatprep.subr.mxu0 0.0
    %541 = vmatpush2.xpose.msra.mxu0 0.0
    %542 = vmatprep.subr.mxu0 0.0
    %543 = vmatpush2.xpose.msra.mxu0 0.0
    %544 = vmatprep.subr.mxu0 0.0
    %545 = vmatpush2.xpose.msra.mxu0 0.0
    %546 = vmatprep.subr.mxu0 0.0
    %547 = vmatpush2.xpose.msra.mxu0 0.0
    %548 = vmatprep.subr.mxu0 0.0
    %549 = vmatpush2.xpose.msra.mxu0 0.0
    %550 = vmatprep.subr.mxu0 0.0
    %551 = vmatpush2.xpose.msra.mxu0 0.0
    %552 = vmatprep.subr.mxu0 0.0
    %553 = vmatpush2.xpose.msra.mxu0 0.0
    %554 = vmatprep.subr.mxu0 0.0
    %555 = vmatpush2.xpose.msra.mxu0 0.0
    %556 = vmatprep.mubr.f32.mxu0 0.0
    %557 = vmatmul.mubr.f32.gmra.mxu0 %v487
    %v558 = vpop.f32.mrf.mxu0
    %v559 = vadd.f32 0.0, %v558
    %v560 = vpop.f32.mrf.mxu0
    %561 = vdwg.mxu0
    %vm562 = vcmask 64512
    %v563 = vsel %vm562, %v483, -inf
    %564 = vmax.xlane.f32.xlu0 %v563
    %v565 = vpop.xlane.xlu0 %564
    %v566 = vsel %vm562, %v559, -inf
    %567 = vmax.xlane.f32.xlu0 %v566
    %v568 = vpop.xlane.xlu0 %567
    %v569 = vlaneseq
    %v570 = vand.u32 %v569, 127
    %vm571 = vcmp.eq.f32.partialorder %v483, %v565
    %vm572 = vcmp.eq.f32.partialorder %v559, %v568
    %v573 = vsel %vm571, %v570, 8
    %v574 = vsel %vm572, %v570, 8
    %v575 = vsel %vm562, %v573, 2147483647
    %v576 = vand.u32 %v575, 65535
    %v577 = vshra.s32 %v575, 16
    %v578 = vcvt.s32.f32 %v576
    %v579 = vcvt.s32.f32 %v577
    %580 = vmin.xlane.f32.xlu0 %v579
    %v581 = vpop.xlane.xlu0 %580
    %vm582 = vcmp.eq.f32.partialorder %v579, %v581
    %v583 = vsel %vm582, %v578, inf
    %584 = vmin.xlane.f32.xlu0 %v583
    %v585 = vpop.xlane.xlu0 %584
    %v586 = vcvt.f32.s32 %v585
    %v587 = vcvt.f32.s32 %v581
    %v588 = vshll.u32 %v587, 16
    %v589 = vadd.s32 %v588, %v586
    %v590 = vsel %vm562, %v574, 2147483647
    %v591 = vand.u32 %v590, 65535
    %v592 = vshra.s32 %v590, 16
    %v593 = vcvt.s32.f32 %v591
    %v594 = vcvt.s32.f32 %v592
    %595 = vmin.xlane.f32.xlu0 %v594
    %v596 = vpop.xlane.xlu0 %595
    %vm597 = vcmp.eq.f32.partialorder %v594, %v596
    %v598 = vsel %vm597, %v593, inf
    %599 = vmin.xlane.f32.xlu0 %v598
    %v600 = vpop.xlane.xlu0 %599
    %v601 = vcvt.f32.s32 %v600
    %v602 = vcvt.f32.s32 %v596
    %v603 = vshll.u32 %v602, 16
    %v604 = vadd.s32 %v603, %v601
    %vm605 = vcmp.eq.s32.totalorder %v570, %v589
    %vm606 = vcmp.eq.s32.totalorder %v570, %v604
    %v607 = vsel %vm605, 1, 0
    %v608 = vsel %vm606, 1, 0
    %v609 = vcvt.s32.f32 %v607
    %v610 = vcvt.s32.f32 %v608
    %v612 = vsel %vm562, %v609, 0
    %614 = vmatprep.subr.mxu0 0.0
    %615 = vmatpush1.msra.mxu0 0.0
    %616 = vmatprep.subr.mxu0 0.0
    %617 = vmatpush1.msra.mxu0 0.0
    %618 = vmatprep.subr.mxu0 0.0
    %619 = vmatpush1.msra.mxu0 0.0
    %620 = vmatprep.subr.mxu0 0.0
    %621 = vmatpush1.msra.mxu0 0.0
    %622 = vmatprep.subr.mxu0 0.0
    %623 = vmatpush1.msra.mxu0 0.0
    %624 = vmatprep.subr.mxu0 0.0
    %625 = vmatpush1.msra.mxu0 0.0
    %626 = vmatprep.subr.mxu0 0.0
    %627 = vmatpush1.msra.mxu0 0.0
    %628 = vmatprep.subr.mxu0 0.0
    %629 = vmatpush1.msra.mxu0 0.0
    %630 = vmatprep.subr.mxu0 0.0
    %631 = vmatpush1.msra.mxu0 0.0
    %632 = vmatprep.subr.mxu0 0.0
    %633 = vmatpush1.msra.mxu0 0.0
    %634 = vmatprep.subr.mxu0 0.0
    %635 = vmatpush1.msra.mxu0 0.0
    %636 = vmatprep.subr.mxu0 0.0
    %637 = vmatpush1.msra.mxu0 0.0
    %638 = vmatprep.subr.mxu0 0.0
    %639 = vmatpush1.msra.mxu0 0.0
    %640 = vmatprep.subr.mxu0 0.0
    %641 = vmatpush1.msra.mxu0 0.0
    %642 = vmatprep.subr.mxu0 0.0
    %643 = vmatpush1.msra.mxu0 0.0
    %644 = vmatprep.subr.mxu0 0.0
    %645 = vmatpush1.msra.mxu0 %v402
    %646 = vmatprep.subr.mxu0 0.0
    %647 = vmatpush2.msra.mxu0 0.0
    %648 = vmatprep.subr.mxu0 0.0
    %649 = vmatpush2.msra.mxu0 0.0
    %650 = vmatprep.subr.mxu0 0.0
    %651 = vmatpush2.msra.mxu0 0.0
    %652 = vmatprep.subr.mxu0 0.0
    %653 = vmatpush2.msra.mxu0 0.0
    %654 = vmatprep.subr.mxu0 0.0
    %655 = vmatpush2.msra.mxu0 0.0
    %656 = vmatprep.subr.mxu0 0.0
    %657 = vmatpush2.msra.mxu0 0.0
    %658 = vmatprep.subr.mxu0 0.0
    %659 = vmatpush2.msra.mxu0 0.0
    %660 = vmatprep.subr.mxu0 0.0
    %661 = vmatpush2.msra.mxu0 0.0
    %662 = vmatprep.subr.mxu0 0.0
    %663 = vmatpush2.msra.mxu0 0.0
    %664 = vmatprep.subr.mxu0 0.0
    %665 = vmatpush2.msra.mxu0 0.0
    %666 = vmatprep.subr.mxu0 0.0
    %667 = vmatpush2.msra.mxu0 0.0
    %668 = vmatprep.subr.mxu0 0.0
    %669 = vmatpush2.msra.mxu0 0.0
    %670 = vmatprep.subr.mxu0 0.0
    %671 = vmatpush2.msra.mxu0 0.0
    %672 = vmatprep.subr.mxu0 0.0
    %673 = vmatpush2.msra.mxu0 0.0
    %674 = vmatprep.subr.mxu0 0.0
    %675 = vmatpush2.msra.mxu0 0.0
    %676 = vmatprep.subr.mxu0 0.0
    %677 = vmatpush2.msra.mxu0 0.0
    %678 = vmatprep.mubr.f32.mxu0 0.0
    %679 = vmatmul.mubr.f32.gmra.mxu0 %v612
    %v680 = vpop.f32.mrf.mxu0
    %v681 = vadd.f32 0.0, %v680
    %v682 = vpop.f32.mrf.mxu0
    %683 = vdwg.mxu0
    %v685 = vsel %vm562, %v610, 0
    %687 = vmatprep.subr.mxu0 0.0
    %688 = vmatpush1.msra.mxu0 0.0
    %689 = vmatprep.subr.mxu0 0.0
    %690 = vmatpush1.msra.mxu0 0.0
    %691 = vmatprep.subr.mxu0 0.0
    %692 = vmatpush1.msra.mxu0 0.0
    %693 = vmatprep.subr.mxu0 0.0
    %694 = vmatpush1.msra.mxu0 0.0
    %695 = vmatprep.subr.mxu0 0.0
    %696 = vmatpush1.msra.mxu0 0.0
    %697 = vmatprep.subr.mxu0 0.0
    %698 = vmatpush1.msra.mxu0 0.0
    %699 = vmatprep.subr.mxu0 0.0
    %700 = vmatpush1.msra.mxu0 0.0
    %701 = vmatprep.subr.mxu0 0.0
    %702 = vmatpush1.msra.mxu0 0.0
    %703 = vmatprep.subr.mxu0 0.0
    %704 = vmatpush1.msra.mxu0 0.0
    %705 = vmatprep.subr.mxu0 0.0
    %706 = vmatpush1.msra.mxu0 0.0
    %707 = vmatprep.subr.mxu0 0.0
    %708 = vmatpush1.msra.mxu0 0.0
    %709 = vmatprep.subr.mxu0 0.0
    %710 = vmatpush1.msra.mxu0 0.0
    %711 = vmatprep.subr.mxu0 0.0
    %712 = vmatpush1.msra.mxu0 0.0
    %713 = vmatprep.subr.mxu0 0.0
    %714 = vmatpush1.msra.mxu0 0.0
    %715 = vmatprep.subr.mxu0 0.0
    %716 = vmatpush1.msra.mxu0 0.0
    %717 = vmatprep.subr.mxu0 0.0
    %718 = vmatpush1.msra.mxu0 %v407
    %719 = vmatprep.subr.mxu0 0.0
    %720 = vmatpush2.msra.mxu0 0.0
    %721 = vmatprep.subr.mxu0 0.0
    %722 = vmatpush2.msra.mxu0 0.0
    %723 = vmatprep.subr.mxu0 0.0
    %724 = vmatpush2.msra.mxu0 0.0
    %725 = vmatprep.subr.mxu0 0.0
    %726 = vmatpush2.msra.mxu0 0.0
    %727 = vmatprep.subr.mxu0 0.0
    %728 = vmatpush2.msra.mxu0 0.0
    %729 = vmatprep.subr.mxu0 0.0
    %730 = vmatpush2.msra.mxu0 0.0
    %731 = vmatprep.subr.mxu0 0.0
    %732 = vmatpush2.msra.mxu0 0.0
    %733 = vmatprep.subr.mxu0 0.0
    %734 = vmatpush2.msra.mxu0 0.0
    %735 = vmatprep.subr.mxu0 0.0
    %736 = vmatpush2.msra.mxu0 0.0
    %737 = vmatprep.subr.mxu0 0.0
    %738 = vmatpush2.msra.mxu0 0.0
    %739 = vmatprep.subr.mxu0 0.0
    %740 = vmatpush2.msra.mxu0 0.0
    %741 = vmatprep.subr.mxu0 0.0
    %742 = vmatpush2.msra.mxu0 0.0
    %743 = vmatprep.subr.mxu0 0.0
    %744 = vmatpush2.msra.mxu0 0.0
    %745 = vmatprep.subr.mxu0 0.0
    %746 = vmatpush2.msra.mxu0 0.0
    %747 = vmatprep.subr.mxu0 0.0
    %748 = vmatpush2.msra.mxu0 0.0
    %749 = vmatprep.subr.mxu0 0.0
    %750 = vmatpush2.msra.mxu0 0.0
    %751 = vmatprep.mubr.f32.mxu0 0.0
    %752 = vmatmul.mubr.f32.gmra.mxu0 %v685
    %v753 = vpop.f32.mrf.mxu0
    %v754 = vadd.f32 0.0, %v753
    %v755 = vpop.f32.mrf.mxu0
    %756 = vdwg.mxu0
    %v757 = vld [vmem:[#allocation13] sm:$0xff]
    %v758 = vld [vmem:[#allocation13 + $0x8] sm:$0xff]
    %v759 = vld [vmem:[#allocation13 + $0x10] sm:$0xff]
    %v760 = vld [vmem:[#allocation13 + $0x18] sm:$0xff]
    %v761 = vld [vmem:[%s9] sm:$0x1]
    %v763 = vlaneseq
    %v764 = vshrl.u32 %v763, 7
    %v765 = vsub.s32 0, %v764
    %v766 = vrot.slane %v761, %v765
    %v769 = vsel %vm151, %v681, 0
    %v772 = vsel %vm151, %v754, 0
    %774 = vmatprep.subr.mxu0 0.0
    %775 = vmatpush1.msra.mxu0 0.0
    %776 = vmatprep.subr.mxu0 0.0
    %777 = vmatpush1.msra.mxu0 0.0
    %778 = vmatprep.subr.mxu0 0.0
    %779 = vmatpush1.msra.mxu0 0.0
    %780 = vmatprep.subr.mxu0 0.0
    %781 = vmatpush1.msra.mxu0 0.0
    %782 = vmatprep.subr.mxu0 0.0
    %783 = vmatpush1.msra.mxu0 0.0
    %784 = vmatprep.subr.mxu0 0.0
    %785 = vmatpush1.msra.mxu0 0.0
    %786 = vmatprep.subr.mxu0 0.0
    %787 = vmatpush1.msra.mxu0 0.0
    %788 = vmatprep.subr.mxu0 0.0
    %789 = vmatpush1.msra.mxu0 0.0
    %790 = vmatprep.subr.mxu0 0.0
    %791 = vmatpush1.msra.mxu0 0.0
    %792 = vmatprep.subr.mxu0 0.0
    %793 = vmatpush1.msra.mxu0 0.0
    %794 = vmatprep.subr.mxu0 0.0
    %795 = vmatpush1.msra.mxu0 0.0
    %796 = vmatprep.subr.mxu0 0.0
    %797 = vmatpush1.msra.mxu0 0.0
    %798 = vmatprep.subr.mxu0 0.0
    %799 = vmatpush1.msra.mxu0 %v760
    %800 = vmatprep.subr.mxu0 0.0
    %801 = vmatpush1.msra.mxu0 %v759
    %802 = vmatprep.subr.mxu0 0.0
    %803 = vmatpush1.msra.mxu0 %v758
    %804 = vmatprep.subr.mxu0 0.0
    %805 = vmatpush1.msra.mxu0 %v757
    %806 = vmatprep.subr.mxu0 0.0
    %807 = vmatpush2.msra.mxu0 0.0
    %808 = vmatprep.subr.mxu0 0.0
    %809 = vmatpush2.msra.mxu0 0.0
    %810 = vmatprep.subr.mxu0 0.0
    %811 = vmatpush2.msra.mxu0 0.0
    %812 = vmatprep.subr.mxu0 0.0
    %813 = vmatpush2.msra.mxu0 0.0
    %814 = vmatprep.subr.mxu0 0.0
    %815 = vmatpush2.msra.mxu0 0.0
    %816 = vmatprep.subr.mxu0 0.0
    %817 = vmatpush2.msra.mxu0 0.0
    %818 = vmatprep.subr.mxu0 0.0
    %819 = vmatpush2.msra.mxu0 0.0
    %820 = vmatprep.subr.mxu0 0.0
    %821 = vmatpush2.msra.mxu0 0.0
    %822 = vmatprep.subr.mxu0 0.0
    %823 = vmatpush2.msra.mxu0 0.0
    %824 = vmatprep.subr.mxu0 0.0
    %825 = vmatpush2.msra.mxu0 0.0
    %826 = vmatprep.subr.mxu0 0.0
    %827 = vmatpush2.msra.mxu0 0.0
    %828 = vmatprep.subr.mxu0 0.0
    %829 = vmatpush2.msra.mxu0 0.0
    %830 = vmatprep.subr.mxu0 0.0
    %831 = vmatpush2.msra.mxu0 0.0
    %832 = vmatprep.subr.mxu0 0.0
    %833 = vmatpush2.msra.mxu0 0.0
    %834 = vmatprep.subr.mxu0 0.0
    %835 = vmatpush2.msra.mxu0 0.0
    %836 = vmatprep.subr.mxu0 0.0
    %837 = vmatpush2.msra.mxu0 0.0
    %838 = vmatprep.mubr.f32.mxu0 0.0
    %839 = vmatmul.mubr.f32.gmra.mxu0 %v769
    %v840 = vpop.f32.mrf.mxu0
    %v841 = vadd.f32 %v766, %v840
    %v842 = vpop.f32.mrf.mxu0
    %843 = vmatprep.mubr.f32.mxu0 0.0
    %844 = vmatmul.mubr.f32.gmra.mxu0 %v772
    %v845 = vpop.f32.mrf.mxu0
    %v846 = vadd.f32 %v766, %v845
    %v847 = vpop.f32.mrf.mxu0
    %848 = vdwg.mxu0
    %849 = vst.msk [vmem:[#allocation14] sm:$0xff] %vm151, %v841
    %850 = vst.msk [vmem:[#allocation14 + $0x8] sm:$0xff] %vm151, %v846
    %851 = vst.msk [vmem:[#allocation15] sm:$0xff] %vm562, %v609
    %852 = vst.msk [vmem:[#allocation15 + $0x8] sm:$0xff] %vm562, %v610
    // Predicated region
    $region70: #{tpu_custom_call.1} parent=1 // pred_check
      _
    $region71: #{tpu_custom_call.1} parent=1 // pred_check_branch
      %854 = sbr.rel (0) target = $region73
    $region72: #{tpu_custom_call.1} parent=1 // pred_region
      %s856 = ssub.s32 256, 256
      %857 = vsyncadd [#allocation4], %s856
      %s858 = sshll.u32 [#allocation14], 4
      %s859 = int_to_ptr.vmem [resolvable:$true] %s858
      %864 = dma.vmem_to_hbm [thread:$0]  %s859, 256, %s10, [#allocation4], 128, 128, 8
    $region73: #{tpu_custom_call.1} parent=1 // pred_fallthru
      _
    // Predicated region
    $region74: #{tpu_custom_call.1} parent=1 // pred_check
      _
    $region75: #{tpu_custom_call.1} parent=1 // pred_check_branch
      %866 = sbr.rel (0) target = $region77
    $region76: #{tpu_custom_call.1} parent=1 // pred_region
      %s868 = ssub.s32 256, 256
      %869 = vsyncadd [#allocation16], %s868
      %s870 = sshll.u32 [#allocation15], 4
      %s871 = int_to_ptr.vmem [resolvable:$true] %s870
      %876 = dma.vmem_to_hbm [thread:$0]  %s871, 256, %s11, [#allocation16], 128, 128, 8
    $region77: #{tpu_custom_call.1} parent=1 // pred_fallthru
      _
    // Predicated region
    $region78: #{tpu_custom_call.1} parent=1 // pred_check
      _
    $region79: #{tpu_custom_call.1} parent=1 // pred_check_branch
      %878 = sbr.rel (0) target = $region81
    $region80: #{tpu_custom_call.1} parent=1 // pred_region
      %879 = dma.done [#allocation4], 256
    $region81: #{tpu_custom_call.1} parent=1 // pred_fallthru
      _
    // Predicated region
    $region82: #{tpu_custom_call.1} parent=1 // pred_check
      _
    $region83: #{tpu_custom_call.1} parent=1 // pred_check_branch
      %881 = sbr.rel (0) target = $region85
    $region84: #{tpu_custom_call.1} parent=1 // pred_region
      %882 = dma.done [#allocation16], 256
    $region85: #{tpu_custom_call.1} parent=1 // pred_fallthru
      _
    %883 = vsyncpa [#allocation3], 1
    %884 = vsyncpa [#allocation6], 1
    %885 = vsyncpa [#allocation9], 1
    %886 = vsyncpa [#allocation12], 1
    %887 = vsyncpa [#allocation4], 1
    %888 = vsyncpa [#allocation16], 1

</llo_original>
